<compile_context>
chip_gen: v7x
topology: tpu7x:2x2x1
jax: 0.10.0
libtpu: 0.0.40
codegen_flags: <defaults>
</compile_context>

<pallas_src>
import jax
import jax.numpy as jnp
from jax import lax
from jax.experimental import pallas as pl
from jax.experimental.pallas import tpu as pltpu


def _linear_kernel(x_ref, w_ref, b_ref, o_ref):
    # x_ref: (tm, K)   w_ref: (N, K)  (PyTorch nn.Linear layout)
    # b_ref: (1, N)    o_ref: (tm, N)
    acc = lax.dot_general(
        x_ref[...],
        w_ref[...],
        dimension_numbers=(((1,), (1,)), ((), ())),  # contract K with K
        preferred_element_type=jnp.float32,
    )
    o_ref[...] = (acc + b_ref[...]).astype(o_ref.dtype)


def _round_up(x, m):
    return ((x + m - 1) // m) * m


def voxel_embedding_forward(xyz, feat, weight, bias, *, tm=512):
    """Pallas implementation of VoxelEmbedding.forward.

    Args:
      xyz:    (B, N, 3)             -- unused (matches PyTorch forward).
      feat:   (B, N, in_chans)      float32
      weight: (embed_dim, in_chans) float32  (PyTorch nn.Linear layout)
      bias:   (embed_dim,)          float32
    Returns:
      (B, N, embed_dim) float32
    """
    del xyz  # unused in forward, exactly as in the reference module
    B, Npts, K = feat.shape
    N = weight.shape[0]
    M = B * Npts

    # Pick the largest tile <= tm (sublane-aligned), then pad M so the grid
    # divides evenly.  Padding rows are computed and discarded.
    tm_eff = min(tm, _round_up(M, 8))
    M_pad = _round_up(M, tm_eff)

    x2d = feat.reshape(M, K)
    if M_pad != M:
        x2d = jnp.pad(x2d, ((0, M_pad - M), (0, 0)))
    b2d = bias.reshape(1, N)  # 2-D so it maps cleanly to (sublane, lane)

    bpe = jnp.dtype(feat.dtype).itemsize
    cost = pl.CostEstimate(
        flops=2 * M_pad * K * N,
        transcendentals=0,
        bytes_accessed=bpe * (M_pad * K + K * N + M_pad * N),
    )

    out2d = pl.pallas_call(
        _linear_kernel,
        out_shape=jax.ShapeDtypeStruct((M_pad, N), feat.dtype),
        grid_spec=pltpu.PrefetchScalarGridSpec(
            num_scalar_prefetch=0,
            grid=(M_pad // tm_eff,),
            in_specs=[
                pl.BlockSpec((tm_eff, K), lambda i: (i, 0)),  # activation rows
                pl.BlockSpec((N, K), lambda i: (0, 0)),       # resident weight
                pl.BlockSpec((1, N), lambda i: (0, 0)),       # resident bias
            ],
            out_specs=pl.BlockSpec((tm_eff, N), lambda i: (i, 0)),
        ),
        compiler_params=pltpu.CompilerParams(
            dimension_semantics=("parallel",),
        ),
        cost_estimate=cost,
    )(x2d, weight, b2d)

    if M_pad != M:
        out2d = out2d[:M]
    return out2d.reshape(B, Npts, N)


def reference_forward(xyz, feat, weight, bias):
    del xyz
    return jnp.einsum("bnk,ek->bne", feat, weight) + bias


if __name__ == "__main__":
    # Small shapes consistent with the module defaults (in_chans=embed_dim=384).
    # Npts deliberately NOT a multiple of the tile to exercise the padding path.
    B, Npts = 2, 200
    in_chans, embed_dim = 384, 384

    key = jax.random.PRNGKey(0)
    k_feat, k_xyz, k_w, k_b = jax.random.split(key, 4)

    feat = jax.random.normal(k_feat, (B, Npts, in_chans), dtype=jnp.float32)
    xyz = jax.random.normal(k_xyz, (B, Npts, 3), dtype=jnp.float32)

    # Deterministic nn.Linear-style parameter init (uniform, like PyTorch default).
    bound = 1.0 / (in_chans ** 0.5)
    weight = jax.random.uniform(
        k_w, (embed_dim, in_chans), minval=-bound, maxval=bound, dtype=jnp.float32
    )
    bias = jax.random.uniform(
        k_b, (embed_dim,), minval=-bound, maxval=bound, dtype=jnp.float32
    )

    out = voxel_embedding_forward(xyz, feat, weight, bias)
    out = jax.block_until_ready(out)

    ref = reference_forward(xyz, feat, weight, bias)
    assert out.shape == (B, Npts, embed_dim)
    assert jnp.allclose(out, ref, atol=1e-4, rtol=1e-4)

    print("KERNEL_OK")
</pallas_src>

<mosaic_0001>
module attributes {stable_mosaic.version = 11 : i64} {
  func.func @_linear_kernel(%arg0: i32, %arg1: memref<400x384xf32, #tpu.memory_space<vmem>>, %arg2: memref<384x384xf32, #tpu.memory_space<vmem>>, %arg3: memref<1x384xf32, #tpu.memory_space<vmem>>, %arg4: memref<400x384xf32, #tpu.memory_space<vmem>>) attributes {dimension_semantics = [#tpu.dimension_semantics<parallel>], iteration_bounds = array<i64: 1>, scalar_prefetch = 0 : i64, scratch_operands = 0 : i64, tpu.core_type = #tpu.core_type<tc>, window_params = [{transform_indices = @transform_0, window_bounds = array<i64: 400, 384>}, {pipeline_mode = #tpu.pipeline_mode<synchronous>, transform_indices = @transform_1, window_bounds = array<i64: 384, 384>}, {pipeline_mode = #tpu.pipeline_mode<synchronous>, transform_indices = @transform_2, window_bounds = array<i64: 1, 384>}, {transform_indices = @transform_3, window_bounds = array<i64: 400, 384>}]} {
    %c0 = arith.constant 0 : index
    %c0_0 = arith.constant 0 : index
    %0 = vector.load %arg1[%c0, %c0_0] : memref<400x384xf32, #tpu.memory_space<vmem>>, vector<400x384xf32>
    %c0_1 = arith.constant 0 : index
    %c0_2 = arith.constant 0 : index
    %1 = vector.load %arg2[%c0_1, %c0_2] : memref<384x384xf32, #tpu.memory_space<vmem>>, vector<384x384xf32>
    %cst = arith.constant dense<0.000000e+00> : vector<400x384xf32>
    %2 = tpu.matmul %0, %1, %cst {dimension_numbers = #tpu.dot_dimension_numbers<[1], [1], [0], [0], [0, 0, 1, 0], [], []>} : vector<400x384xf32>, vector<384x384xf32>, vector<400x384xf32> -> vector<400x384xf32>
    %c0_3 = arith.constant 0 : index
    %c0_4 = arith.constant 0 : index
    %3 = vector.load %arg3[%c0_3, %c0_4] : memref<1x384xf32, #tpu.memory_space<vmem>>, vector<1x384xf32>
    %4 = vector.broadcast %3 : vector<1x384xf32> to vector<400x384xf32>
    %5 = arith.addf %2, %4 : vector<400x384xf32>
    %c0_5 = arith.constant 0 : index
    %c0_6 = arith.constant 0 : index
    %6 = vector.load %arg4[%c0_5, %c0_6] : memref<400x384xf32, #tpu.memory_space<vmem>>, vector<400x384xf32>
    tpu.vector_store %arg4[%c0_5, %c0_6], %5 {strides = array<i32>} : memref<400x384xf32, #tpu.memory_space<vmem>>, vector<400x384xf32>,
    return
  }
  func.func @transform_0(%arg0: i32) -> (i32, i32) {
    %c0_i32 = arith.constant 0 : i32
    %c0_i32_0 = arith.constant 0 : i32
    return %arg0, %c0_i32 : i32, i32
  }
  func.func @transform_1(%arg0: i32) -> (i32, i32) {
    %c0_i32 = arith.constant 0 : i32
    %c0_i32_0 = arith.constant 0 : i32
    %c0_i32_1 = arith.constant 0 : i32
    return %c0_i32, %c0_i32_0 : i32, i32
  }
  func.func @transform_2(%arg0: i32) -> (i32, i32) {
    %c0_i32 = arith.constant 0 : i32
    %c0_i32_0 = arith.constant 0 : i32
    %c0_i32_1 = arith.constant 0 : i32
    return %c0_i32, %c0_i32_0 : i32, i32
  }
  func.func @transform_3(%arg0: i32) -> (i32, i32) {
    %c0_i32 = arith.constant 0 : i32
    %c0_i32_0 = arith.constant 0 : i32
    return %arg0, %c0_i32 : i32, i32
  }
}

</mosaic_0001>

<llo_original>
// kernel: tpu_custom_call.1
$region0: #{tpu_custom_call.1}
  #allocation0 [shape = 'u32[]', space=smem, size = 0x4, offset = 0x4, fixed_abs, tag = 'smem constant byte address 0x4 - core index']
  #allocation1 [shape = 'u32[144,128]{1,0:T(1,128)}', space=vmem, size = 0x12000, scoped, tag = 'internal scratch']
  %s0 = inlined_call_operand.hbm [shape: f32[400,384], index: 0, kind: input, shape index: {}]
  %s1 = inlined_call_operand.hbm [shape: f32[384,384], index: 1, kind: input, shape index: {}]
  %s2 = inlined_call_operand.vmem [shape: f32[1,384], index: 2, kind: input, shape index: {}]
  %s3 = inlined_call_operand.hbm [shape: f32[400,384], index: 3, kind: output, shape index: {}]
  %s4 = sld [smem:[#allocation0]]
  $region30: #{tpu_custom_call.1} parent=0
    _
  %s6 = ssub.s32 1, %s4
  %s7 = scalar_select 0, %s6, %s4
  $region1: #{tpu_custom_call.1} parent=0
    #allocation2 [shape = 'u8[614400]{0}', space=vmem, size = 0x96000, scoped, tag = 'input window, operand 0, single buffered']
    #allocation3 [shape = 's32[1]{0}', space=sflag, size = 0x4, scoped, tag = 'scoped memory for tpu_custom_call.1']
    #allocation4 [shape = 's32[1]{0}', space=sflag, size = 0x4, scoped, tag = 'scoped memory for tpu_custom_call.1']
    #allocation5 [shape = 'u8[589824]{0}', space=vmem, size = 0x90000, scoped, tag = 'input window, operand 1, single buffered']
    #allocation6 [shape = 's32[1]{0}', space=sflag, size = 0x4, scoped, tag = 'scoped memory for tpu_custom_call.1']
    #allocation7 [shape = 'u8[614400]{0}', space=vmem, size = 0x96000, scoped, tag = 'output window, operand 0, single buffered']
    %8 = vsyncpa [#allocation3], 0
    %9 = vsyncpa [#allocation6], 0
    %10 = vsyncpa [#allocation4], 0
    // Predicated region
    $region2: #{tpu_custom_call.1} parent=1 // pred_check
      _
    $region3: #{tpu_custom_call.1} parent=1 // pred_check_branch
      %12 = sbr.rel (0) target = $region5
    $region4: #{tpu_custom_call.1} parent=1 // pred_region
      %s14 = ssub.s32 19200, 19200
      %15 = vsyncadd [#allocation3], %s14
      %s16 = sshll.u32 [#allocation2], 4
      %s17 = int_to_ptr.vmem [resolvable:$true] %s16
      %22 = dma.hbm_to_vmem [thread:$0]  %s0, 19200, %s17, [#allocation3], 384, 384, 24
    $region5: #{tpu_custom_call.1} parent=1 // pred_fallthru
      _
    // Predicated region
    $region6: #{tpu_custom_call.1} parent=1 // pred_check
      _
    $region7: #{tpu_custom_call.1} parent=1 // pred_check_branch
      %24 = sbr.rel (0) target = $region9
    $region8: #{tpu_custom_call.1} parent=1 // pred_region
      %s26 = ssub.s32 18432, 18432
      %27 = vsyncadd [#allocation6], %s26
      %s28 = sshll.u32 [#allocation5], 4
      %s29 = int_to_ptr.vmem [resolvable:$true] %s28
      %34 = dma.hbm_to_vmem [thread:$0]  %s1, 18432, %s29, [#allocation6], 384, 384, 24
    $region9: #{tpu_custom_call.1} parent=1 // pred_fallthru
      _
    // Predicated region
    $region10: #{tpu_custom_call.1} parent=1 // pred_check
      _
    $region11: #{tpu_custom_call.1} parent=1 // pred_check_branch
      %36 = sbr.rel (0) target = $region13
    $region12: #{tpu_custom_call.1} parent=1 // pred_region
      _
    $region13: #{tpu_custom_call.1} parent=1 // pred_fallthru
      _
    // Predicated region
    $region14: #{tpu_custom_call.1} parent=1 // pred_check
      _
    $region15: #{tpu_custom_call.1} parent=1 // pred_check_branch
      %38 = sbr.rel (0) target = $region17
    $region16: #{tpu_custom_call.1} parent=1 // pred_region
      %39 = dma.done [#allocation3], 19200
    $region17: #{tpu_custom_call.1} parent=1 // pred_fallthru
      _
    // Predicated region
    $region18: #{tpu_custom_call.1} parent=1 // pred_check
      _
    $region19: #{tpu_custom_call.1} parent=1 // pred_check_branch
      %41 = sbr.rel (0) target = $region21
    $region20: #{tpu_custom_call.1} parent=1 // pred_region
      %42 = dma.done [#allocation6], 18432
    $region21: #{tpu_custom_call.1} parent=1 // pred_fallthru
      _
    %v43 = vld [vmem:[#allocation2] sm:$0xff]
    %v44 = vld [vmem:[#allocation2 + $0x8] sm:$0xff]
    %v45 = vld [vmem:[#allocation2 + $0x10] sm:$0xff]
    %v46 = vld [vmem:[#allocation2 + $0x18] sm:$0xff]
    %v47 = vld [vmem:[#allocation2 + $0x20] sm:$0xff]
    %v48 = vld [vmem:[#allocation2 + $0x28] sm:$0xff]
    %v49 = vld [vmem:[#allocation2 + $0x30] sm:$0xff]
    %v50 = vld [vmem:[#allocation2 + $0x38] sm:$0xff]
    %v51 = vld [vmem:[#allocation2 + $0x40] sm:$0xff]
    %v52 = vld [vmem:[#allocation2 + $0x48] sm:$0xff]
    %v53 = vld [vmem:[#allocation2 + $0x50] sm:$0xff]
    %v54 = vld [vmem:[#allocation2 + $0x58] sm:$0xff]
    %v55 = vld [vmem:[#allocation2 + $0x60] sm:$0xff]
    %v56 = vld [vmem:[#allocation2 + $0x68] sm:$0xff]
    %v57 = vld [vmem:[#allocation2 + $0x70] sm:$0xff]
    %v58 = vld [vmem:[#allocation2 + $0x78] sm:$0xff]
    %v59 = vld [vmem:[#allocation2 + $0x80] sm:$0xff]
    %v60 = vld [vmem:[#allocation2 + $0x88] sm:$0xff]
    %v61 = vld [vmem:[#allocation2 + $0x90] sm:$0xff]
    %v62 = vld [vmem:[#allocation2 + $0x98] sm:$0xff]
    %v63 = vld [vmem:[#allocation2 + $0xa0] sm:$0xff]
    %v64 = vld [vmem:[#allocation2 + $0xa8] sm:$0xff]
    %v65 = vld [vmem:[#allocation2 + $0xb0] sm:$0xff]
    %v66 = vld [vmem:[#allocation2 + $0xb8] sm:$0xff]
    %v67 = vld [vmem:[#allocation2 + $0xc0] sm:$0xff]
    %v68 = vld [vmem:[#allocation2 + $0xc8] sm:$0xff]
    %v69 = vld [vmem:[#allocation2 + $0xd0] sm:$0xff]
    %v70 = vld [vmem:[#allocation2 + $0xd8] sm:$0xff]
    %v71 = vld [vmem:[#allocation2 + $0xe0] sm:$0xff]
    %v72 = vld [vmem:[#allocation2 + $0xe8] sm:$0xff]
    %v73 = vld [vmem:[#allocation2 + $0xf0] sm:$0xff]
    %v74 = vld [vmem:[#allocation2 + $0xf8] sm:$0xff]
    %v75 = vld [vmem:[#allocation2 + $0x100] sm:$0xff]
    %v76 = vld [vmem:[#allocation2 + $0x108] sm:$0xff]
    %v77 = vld [vmem:[#allocation2 + $0x110] sm:$0xff]
    %v78 = vld [vmem:[#allocation2 + $0x118] sm:$0xff]
    %v79 = vld [vmem:[#allocation2 + $0x120] sm:$0xff]
    %v80 = vld [vmem:[#allocation2 + $0x128] sm:$0xff]
    %v81 = vld [vmem:[#allocation2 + $0x130] sm:$0xff]
    %v82 = vld [vmem:[#allocation2 + $0x138] sm:$0xff]
    %v83 = vld [vmem:[#allocation2 + $0x140] sm:$0xff]
    %v84 = vld [vmem:[#allocation2 + $0x148] sm:$0xff]
    %v85 = vld [vmem:[#allocation2 + $0x150] sm:$0xff]
    %v86 = vld [vmem:[#allocation2 + $0x158] sm:$0xff]
    %v87 = vld [vmem:[#allocation2 + $0x160] sm:$0xff]
    %v88 = vld [vmem:[#allocation2 + $0x168] sm:$0xff]
    %v89 = vld [vmem:[#allocation2 + $0x170] sm:$0xff]
    %v90 = vld [vmem:[#allocation2 + $0x178] sm:$0xff]
    %v91 = vld [vmem:[#allocation2 + $0x180] sm:$0xff]
    %v92 = vld [vmem:[#allocation2 + $0x188] sm:$0xff]
    %v93 = vld [vmem:[#allocation2 + $0x190] sm:$0xff]
    %v94 = vld [vmem:[#allocation2 + $0x198] sm:$0xff]
    %v95 = vld [vmem:[#allocation2 + $0x1a0] sm:$0xff]
    %v96 = vld [vmem:[#allocation2 + $0x1a8] sm:$0xff]
    %v97 = vld [vmem:[#allocation2 + $0x1b0] sm:$0xff]
    %v98 = vld [vmem:[#allocation2 + $0x1b8] sm:$0xff]
    %v99 = vld [vmem:[#allocation2 + $0x1c0] sm:$0xff]
    %v100 = vld [vmem:[#allocation2 + $0x1c8] sm:$0xff]
    %v101 = vld [vmem:[#allocation2 + $0x1d0] sm:$0xff]
    %v102 = vld [vmem:[#allocation2 + $0x1d8] sm:$0xff]
    %v103 = vld [vmem:[#allocation2 + $0x1e0] sm:$0xff]
    %v104 = vld [vmem:[#allocation2 + $0x1e8] sm:$0xff]
    %v105 = vld [vmem:[#allocation2 + $0x1f0] sm:$0xff]
    %v106 = vld [vmem:[#allocation2 + $0x1f8] sm:$0xff]
    %v107 = vld [vmem:[#allocation2 + $0x200] sm:$0xff]
    %v108 = vld [vmem:[#allocation2 + $0x208] sm:$0xff]
    %v109 = vld [vmem:[#allocation2 + $0x210] sm:$0xff]
    %v110 = vld [vmem:[#allocation2 + $0x218] sm:$0xff]
    %v111 = vld [vmem:[#allocation2 + $0x220] sm:$0xff]
    %v112 = vld [vmem:[#allocation2 + $0x228] sm:$0xff]
    %v113 = vld [vmem:[#allocation2 + $0x230] sm:$0xff]
    %v114 = vld [vmem:[#allocation2 + $0x238] sm:$0xff]
    %v115 = vld [vmem:[#allocation2 + $0x240] sm:$0xff]
    %v116 = vld [vmem:[#allocation2 + $0x248] sm:$0xff]
    %v117 = vld [vmem:[#allocation2 + $0x250] sm:$0xff]
    %v118 = vld [vmem:[#allocation2 + $0x258] sm:$0xff]
    %v119 = vld [vmem:[#allocation2 + $0x260] sm:$0xff]
    %v120 = vld [vmem:[#allocation2 + $0x268] sm:$0xff]
    %v121 = vld [vmem:[#allocation2 + $0x270] sm:$0xff]
    %v122 = vld [vmem:[#allocation2 + $0x278] sm:$0xff]
    %v123 = vld [vmem:[#allocation2 + $0x280] sm:$0xff]
    %v124 = vld [vmem:[#allocation2 + $0x288] sm:$0xff]
    %v125 = vld [vmem:[#allocation2 + $0x290] sm:$0xff]
    %v126 = vld [vmem:[#allocation2 + $0x298] sm:$0xff]
    %v127 = vld [vmem:[#allocation2 + $0x2a0] sm:$0xff]
    %v128 = vld [vmem:[#allocation2 + $0x2a8] sm:$0xff]
    %v129 = vld [vmem:[#allocation2 + $0x2b0] sm:$0xff]
    %v130 = vld [vmem:[#allocation2 + $0x2b8] sm:$0xff]
    %v131 = vld [vmem:[#allocation2 + $0x2c0] sm:$0xff]
    %v132 = vld [vmem:[#allocation2 + $0x2c8] sm:$0xff]
    %v133 = vld [vmem:[#allocation2 + $0x2d0] sm:$0xff]
    %v134 = vld [vmem:[#allocation2 + $0x2d8] sm:$0xff]
    %v135 = vld [vmem:[#allocation2 + $0x2e0] sm:$0xff]
    %v136 = vld [vmem:[#allocation2 + $0x2e8] sm:$0xff]
    %v137 = vld [vmem:[#allocation2 + $0x2f0] sm:$0xff]
    %v138 = vld [vmem:[#allocation2 + $0x2f8] sm:$0xff]
    %v139 = vld [vmem:[#allocation2 + $0x300] sm:$0xff]
    %v140 = vld [vmem:[#allocation2 + $0x308] sm:$0xff]
    %v141 = vld [vmem:[#allocation2 + $0x310] sm:$0xff]
    %v142 = vld [vmem:[#allocation2 + $0x318] sm:$0xff]
    %v143 = vld [vmem:[#allocation2 + $0x320] sm:$0xff]
    %v144 = vld [vmem:[#allocation2 + $0x328] sm:$0xff]
    %v145 = vld [vmem:[#allocation2 + $0x330] sm:$0xff]
    %v146 = vld [vmem:[#allocation2 + $0x338] sm:$0xff]
    %v147 = vld [vmem:[#allocation2 + $0x340] sm:$0xff]
    %v148 = vld [vmem:[#allocation2 + $0x348] sm:$0xff]
    %v149 = vld [vmem:[#allocation2 + $0x350] sm:$0xff]
    %v150 = vld [vmem:[#allocation2 + $0x358] sm:$0xff]
    %v151 = vld [vmem:[#allocation2 + $0x360] sm:$0xff]
    %v152 = vld [vmem:[#allocation2 + $0x368] sm:$0xff]
    %v153 = vld [vmem:[#allocation2 + $0x370] sm:$0xff]
    %v154 = vld [vmem:[#allocation2 + $0x378] sm:$0xff]
    %v155 = vld [vmem:[#allocation2 + $0x380] sm:$0xff]
    %v156 = vld [vmem:[#allocation2 + $0x388] sm:$0xff]
    %v157 = vld [vmem:[#allocation2 + $0x390] sm:$0xff]
    %v158 = vld [vmem:[#allocation2 + $0x398] sm:$0xff]
    %v159 = vld [vmem:[#allocation2 + $0x3a0] sm:$0xff]
    %v160 = vld [vmem:[#allocation2 + $0x3a8] sm:$0xff]
    %v161 = vld [vmem:[#allocation2 + $0x3b0] sm:$0xff]
    %v162 = vld [vmem:[#allocation2 + $0x3b8] sm:$0xff]
    %v163 = vld [vmem:[#allocation2 + $0x3c0] sm:$0xff]
    %v164 = vld [vmem:[#allocation2 + $0x3c8] sm:$0xff]
    %v165 = vld [vmem:[#allocation2 + $0x3d0] sm:$0xff]
    %v166 = vld [vmem:[#allocation2 + $0x3d8] sm:$0xff]
    %v167 = vld [vmem:[#allocation2 + $0x3e0] sm:$0xff]
    %v168 = vld [vmem:[#allocation2 + $0x3e8] sm:$0xff]
    %v169 = vld [vmem:[#allocation2 + $0x3f0] sm:$0xff]
    %v170 = vld [vmem:[#allocation2 + $0x3f8] sm:$0xff]
    %v171 = vld [vmem:[#allocation2 + $0x400] sm:$0xff]
    %v172 = vld [vmem:[#allocation2 + $0x408] sm:$0xff]
    %v173 = vld [vmem:[#allocation2 + $0x410] sm:$0xff]
    %v174 = vld [vmem:[#allocation2 + $0x418] sm:$0xff]
    %v175 = vld [vmem:[#allocation2 + $0x420] sm:$0xff]
    %v176 = vld [vmem:[#allocation2 + $0x428] sm:$0xff]
    %v177 = vld [vmem:[#allocation2 + $0x430] sm:$0xff]
    %v178 = vld [vmem:[#allocation2 + $0x438] sm:$0xff]
    %v179 = vld [vmem:[#allocation2 + $0x440] sm:$0xff]
    %v180 = vld [vmem:[#allocation2 + $0x448] sm:$0xff]
    %v181 = vld [vmem:[#allocation2 + $0x450] sm:$0xff]
    %v182 = vld [vmem:[#allocation2 + $0x458] sm:$0xff]
    %v183 = vld [vmem:[#allocation2 + $0x460] sm:$0xff]
    %v184 = vld [vmem:[#allocation2 + $0x468] sm:$0xff]
    %v185 = vld [vmem:[#allocation2 + $0x470] sm:$0xff]
    %v186 = vld [vmem:[#allocation2 + $0x478] sm:$0xff]
    %v187 = vld [vmem:[#allocation2 + $0x480] sm:$0xff]
    %v188 = vld [vmem:[#allocation2 + $0x488] sm:$0xff]
    %v189 = vld [vmem:[#allocation2 + $0x490] sm:$0xff]
    %v190 = vld [vmem:[#allocation2 + $0x498] sm:$0xff]
    %v191 = vld [vmem:[#allocation2 + $0x4a0] sm:$0xff]
    %v192 = vld [vmem:[#allocation2 + $0x4a8] sm:$0xff]
    %v193 = vld [vmem:[#allocation5] sm:$0xff]
    %v194 = vld [vmem:[#allocation5 + $0x8] sm:$0xff]
    %v195 = vld [vmem:[#allocation5 + $0x10] sm:$0xff]
    %v196 = vld [vmem:[#allocation5 + $0x18] sm:$0xff]
    %v197 = vld [vmem:[#allocation5 + $0x20] sm:$0xff]
    %v198 = vld [vmem:[#allocation5 + $0x28] sm:$0xff]
    %v199 = vld [vmem:[#allocation5 + $0x30] sm:$0xff]
    %v200 = vld [vmem:[#allocation5 + $0x38] sm:$0xff]
    %v201 = vld [vmem:[#allocation5 + $0x40] sm:$0xff]
    %v202 = vld [vmem:[#allocation5 + $0x48] sm:$0xff]
    %v203 = vld [vmem:[#allocation5 + $0x50] sm:$0xff]
    %v204 = vld [vmem:[#allocation5 + $0x58] sm:$0xff]
    %v205 = vld [vmem:[#allocation5 + $0x60] sm:$0xff]
    %v206 = vld [vmem:[#allocation5 + $0x68] sm:$0xff]
    %v207 = vld [vmem:[#allocation5 + $0x70] sm:$0xff]
    %v208 = vld [vmem:[#allocation5 + $0x78] sm:$0xff]
    %v209 = vld [vmem:[#allocation5 + $0x80] sm:$0xff]
    %v210 = vld [vmem:[#allocation5 + $0x88] sm:$0xff]
    %v211 = vld [vmem:[#allocation5 + $0x90] sm:$0xff]
    %v212 = vld [vmem:[#allocation5 + $0x98] sm:$0xff]
    %v213 = vld [vmem:[#allocation5 + $0xa0] sm:$0xff]
    %v214 = vld [vmem:[#allocation5 + $0xa8] sm:$0xff]
    %v215 = vld [vmem:[#allocation5 + $0xb0] sm:$0xff]
    %v216 = vld [vmem:[#allocation5 + $0xb8] sm:$0xff]
    %v217 = vld [vmem:[#allocation5 + $0xc0] sm:$0xff]
    %v218 = vld [vmem:[#allocation5 + $0xc8] sm:$0xff]
    %v219 = vld [vmem:[#allocation5 + $0xd0] sm:$0xff]
    %v220 = vld [vmem:[#allocation5 + $0xd8] sm:$0xff]
    %v221 = vld [vmem:[#allocation5 + $0xe0] sm:$0xff]
    %v222 = vld [vmem:[#allocation5 + $0xe8] sm:$0xff]
    %v223 = vld [vmem:[#allocation5 + $0xf0] sm:$0xff]
    %v224 = vld [vmem:[#allocation5 + $0xf8] sm:$0xff]
    %v225 = vld [vmem:[#allocation5 + $0x100] sm:$0xff]
    %v226 = vld [vmem:[#allocation5 + $0x108] sm:$0xff]
    %v227 = vld [vmem:[#allocation5 + $0x110] sm:$0xff]
    %v228 = vld [vmem:[#allocation5 + $0x118] sm:$0xff]
    %v229 = vld [vmem:[#allocation5 + $0x120] sm:$0xff]
    %v230 = vld [vmem:[#allocation5 + $0x128] sm:$0xff]
    %v231 = vld [vmem:[#allocation5 + $0x130] sm:$0xff]
    %v232 = vld [vmem:[#allocation5 + $0x138] sm:$0xff]
    %v233 = vld [vmem:[#allocation5 + $0x140] sm:$0xff]
    %v234 = vld [vmem:[#allocation5 + $0x148] sm:$0xff]
    %v235 = vld [vmem:[#allocation5 + $0x150] sm:$0xff]
    %v236 = vld [vmem:[#allocation5 + $0x158] sm:$0xff]
    %v237 = vld [vmem:[#allocation5 + $0x160] sm:$0xff]
    %v238 = vld [vmem:[#allocation5 + $0x168] sm:$0xff]
    %v239 = vld [vmem:[#allocation5 + $0x170] sm:$0xff]
    %v240 = vld [vmem:[#allocation5 + $0x178] sm:$0xff]
    %v241 = vld [vmem:[#allocation5 + $0x180] sm:$0xff]
    %v242 = vld [vmem:[#allocation5 + $0x188] sm:$0xff]
    %v243 = vld [vmem:[#allocation5 + $0x190] sm:$0xff]
    %v244 = vld [vmem:[#allocation5 + $0x198] sm:$0xff]
    %v245 = vld [vmem:[#allocation5 + $0x1a0] sm:$0xff]
    %v246 = vld [vmem:[#allocation5 + $0x1a8] sm:$0xff]
    %v247 = vld [vmem:[#allocation5 + $0x1b0] sm:$0xff]
    %v248 = vld [vmem:[#allocation5 + $0x1b8] sm:$0xff]
    %v249 = vld [vmem:[#allocation5 + $0x1c0] sm:$0xff]
    %v250 = vld [vmem:[#allocation5 + $0x1c8] sm:$0xff]
    %v251 = vld [vmem:[#allocation5 + $0x1d0] sm:$0xff]
    %v252 = vld [vmem:[#allocation5 + $0x1d8] sm:$0xff]
    %v253 = vld [vmem:[#allocation5 + $0x1e0] sm:$0xff]
    %v254 = vld [vmem:[#allocation5 + $0x1e8] sm:$0xff]
    %v255 = vld [vmem:[#allocation5 + $0x1f0] sm:$0xff]
    %v256 = vld [vmem:[#allocation5 + $0x1f8] sm:$0xff]
    %v257 = vld [vmem:[#allocation5 + $0x200] sm:$0xff]
    %v258 = vld [vmem:[#allocation5 + $0x208] sm:$0xff]
    %v259 = vld [vmem:[#allocation5 + $0x210] sm:$0xff]
    %v260 = vld [vmem:[#allocation5 + $0x218] sm:$0xff]
    %v261 = vld [vmem:[#allocation5 + $0x220] sm:$0xff]
    %v262 = vld [vmem:[#allocation5 + $0x228] sm:$0xff]
    %v263 = vld [vmem:[#allocation5 + $0x230] sm:$0xff]
    %v264 = vld [vmem:[#allocation5 + $0x238] sm:$0xff]
    %v265 = vld [vmem:[#allocation5 + $0x240] sm:$0xff]
    %v266 = vld [vmem:[#allocation5 + $0x248] sm:$0xff]
    %v267 = vld [vmem:[#allocation5 + $0x250] sm:$0xff]
    %v268 = vld [vmem:[#allocation5 + $0x258] sm:$0xff]
    %v269 = vld [vmem:[#allocation5 + $0x260] sm:$0xff]
    %v270 = vld [vmem:[#allocation5 + $0x268] sm:$0xff]
    %v271 = vld [vmem:[#allocation5 + $0x270] sm:$0xff]
    %v272 = vld [vmem:[#allocation5 + $0x278] sm:$0xff]
    %v273 = vld [vmem:[#allocation5 + $0x280] sm:$0xff]
    %v274 = vld [vmem:[#allocation5 + $0x288] sm:$0xff]
    %v275 = vld [vmem:[#allocation5 + $0x290] sm:$0xff]
    %v276 = vld [vmem:[#allocation5 + $0x298] sm:$0xff]
    %v277 = vld [vmem:[#allocation5 + $0x2a0] sm:$0xff]
    %v278 = vld [vmem:[#allocation5 + $0x2a8] sm:$0xff]
    %v279 = vld [vmem:[#allocation5 + $0x2b0] sm:$0xff]
    %v280 = vld [vmem:[#allocation5 + $0x2b8] sm:$0xff]
    %v281 = vld [vmem:[#allocation5 + $0x2c0] sm:$0xff]
    %v282 = vld [vmem:[#allocation5 + $0x2c8] sm:$0xff]
    %v283 = vld [vmem:[#allocation5 + $0x2d0] sm:$0xff]
    %v284 = vld [vmem:[#allocation5 + $0x2d8] sm:$0xff]
    %v285 = vld [vmem:[#allocation5 + $0x2e0] sm:$0xff]
    %v286 = vld [vmem:[#allocation5 + $0x2e8] sm:$0xff]
    %v287 = vld [vmem:[#allocation5 + $0x2f0] sm:$0xff]
    %v288 = vld [vmem:[#allocation5 + $0x2f8] sm:$0xff]
    %v289 = vld [vmem:[#allocation5 + $0x300] sm:$0xff]
    %v290 = vld [vmem:[#allocation5 + $0x308] sm:$0xff]
    %v291 = vld [vmem:[#allocation5 + $0x310] sm:$0xff]
    %v292 = vld [vmem:[#allocation5 + $0x318] sm:$0xff]
    %v293 = vld [vmem:[#allocation5 + $0x320] sm:$0xff]
    %v294 = vld [vmem:[#allocation5 + $0x328] sm:$0xff]
    %v295 = vld [vmem:[#allocation5 + $0x330] sm:$0xff]
    %v296 = vld [vmem:[#allocation5 + $0x338] sm:$0xff]
    %v297 = vld [vmem:[#allocation5 + $0x340] sm:$0xff]
    %v298 = vld [vmem:[#allocation5 + $0x348] sm:$0xff]
    %v299 = vld [vmem:[#allocation5 + $0x350] sm:$0xff]
    %v300 = vld [vmem:[#allocation5 + $0x358] sm:$0xff]
    %v301 = vld [vmem:[#allocation5 + $0x360] sm:$0xff]
    %v302 = vld [vmem:[#allocation5 + $0x368] sm:$0xff]
    %v303 = vld [vmem:[#allocation5 + $0x370] sm:$0xff]
    %v304 = vld [vmem:[#allocation5 + $0x378] sm:$0xff]
    %v305 = vld [vmem:[#allocation5 + $0x380] sm:$0xff]
    %v306 = vld [vmem:[#allocation5 + $0x388] sm:$0xff]
    %v307 = vld [vmem:[#allocation5 + $0x390] sm:$0xff]
    %v308 = vld [vmem:[#allocation5 + $0x398] sm:$0xff]
    %v309 = vld [vmem:[#allocation5 + $0x3a0] sm:$0xff]
    %v310 = vld [vmem:[#allocation5 + $0x3a8] sm:$0xff]
    %v311 = vld [vmem:[#allocation5 + $0x3b0] sm:$0xff]
    %v312 = vld [vmem:[#allocation5 + $0x3b8] sm:$0xff]
    %v313 = vld [vmem:[#allocation5 + $0x3c0] sm:$0xff]
    %v314 = vld [vmem:[#allocation5 + $0x3c8] sm:$0xff]
    %v315 = vld [vmem:[#allocation5 + $0x3d0] sm:$0xff]
    %v316 = vld [vmem:[#allocation5 + $0x3d8] sm:$0xff]
    %v317 = vld [vmem:[#allocation5 + $0x3e0] sm:$0xff]
    %v318 = vld [vmem:[#allocation5 + $0x3e8] sm:$0xff]
    %v319 = vld [vmem:[#allocation5 + $0x3f0] sm:$0xff]
    %v320 = vld [vmem:[#allocation5 + $0x3f8] sm:$0xff]
    %v321 = vld [vmem:[#allocation5 + $0x400] sm:$0xff]
    %v322 = vld [vmem:[#allocation5 + $0x408] sm:$0xff]
    %v323 = vld [vmem:[#allocation5 + $0x410] sm:$0xff]
    %v324 = vld [vmem:[#allocation5 + $0x418] sm:$0xff]
    %v325 = vld [vmem:[#allocation5 + $0x420] sm:$0xff]
    %v326 = vld [vmem:[#allocation5 + $0x428] sm:$0xff]
    %v327 = vld [vmem:[#allocation5 + $0x430] sm:$0xff]
    %v328 = vld [vmem:[#allocation5 + $0x438] sm:$0xff]
    %v329 = vld [vmem:[#allocation5 + $0x440] sm:$0xff]
    %v330 = vld [vmem:[#allocation5 + $0x448] sm:$0xff]
    %v331 = vld [vmem:[#allocation5 + $0x450] sm:$0xff]
    %v332 = vld [vmem:[#allocation5 + $0x458] sm:$0xff]
    %v333 = vld [vmem:[#allocation5 + $0x460] sm:$0xff]
    %v334 = vld [vmem:[#allocation5 + $0x468] sm:$0xff]
    %v335 = vld [vmem:[#allocation5 + $0x470] sm:$0xff]
    %v336 = vld [vmem:[#allocation5 + $0x478] sm:$0xff]
    %v337 = vld [vmem:[%s2] sm:$0x7]
    %v339 = vlaneseq
    %v340 = vshrl.u32 %v339, 7
    %v341 = vsub.s32 0, %v340
    %v342 = vrot.slane %v337, %v341
    %v343 = vlaneseq
    %v344 = vshrl.u32 %v343, 7
    %v345 = vsub.s32 1, %v344
    %v346 = vrot.slane %v337, %v345
    %v347 = vlaneseq
    %v348 = vshrl.u32 %v347, 7
    %v349 = vsub.s32 2, %v348
    %v350 = vrot.slane %v337, %v349
    %354 = vmatprep.subr.mxu0 %v194
    %355 = vmatpush1.xpose.msra.mxu0 %v193
    %356 = vmatprep.subr.mxu0 %v197
    %357 = vmatpush1.xpose.msra.mxu0 %v196
    %358 = vmatprep.subr.mxu0 %v200
    %359 = vmatpush1.xpose.msra.mxu0 %v199
    %360 = vmatprep.subr.mxu0 %v203
    %361 = vmatpush1.xpose.msra.mxu0 %v202
    %362 = vmatprep.subr.mxu0 %v206
    %363 = vmatpush1.xpose.msra.mxu0 %v205
    %364 = vmatprep.subr.mxu0 %v209
    %365 = vmatpush1.xpose.msra.mxu0 %v208
    %366 = vmatprep.subr.mxu0 %v212
    %367 = vmatpush1.xpose.msra.mxu0 %v211
    %368 = vmatprep.subr.mxu0 %v215
    %369 = vmatpush1.xpose.msra.mxu0 %v214
    %370 = vmatprep.subr.mxu0 %v218
    %371 = vmatpush1.xpose.msra.mxu0 %v217
    %372 = vmatprep.subr.mxu0 %v221
    %373 = vmatpush1.xpose.msra.mxu0 %v220
    %374 = vmatprep.subr.mxu0 %v224
    %375 = vmatpush1.xpose.msra.mxu0 %v223
    %376 = vmatprep.subr.mxu0 %v227
    %377 = vmatpush1.xpose.msra.mxu0 %v226
    %378 = vmatprep.subr.mxu0 %v230
    %379 = vmatpush1.xpose.msra.mxu0 %v229
    %380 = vmatprep.subr.mxu0 %v233
    %381 = vmatpush1.xpose.msra.mxu0 %v232
    %382 = vmatprep.subr.mxu0 %v236
    %383 = vmatpush1.xpose.msra.mxu0 %v235
    %384 = vmatprep.subr.mxu0 %v239
    %385 = vmatpush1.xpose.msra.mxu0 %v238
    %386 = vmatprep.subr.mxu0 %v242
    %387 = vmatpush1.xpose.msra.mxu0 %v241
    %388 = vmatprep.subr.mxu0 %v245
    %389 = vmatpush1.xpose.msra.mxu0 %v244
    %390 = vmatprep.subr.mxu0 %v248
    %391 = vmatpush1.xpose.msra.mxu0 %v247
    %392 = vmatprep.subr.mxu0 %v251
    %393 = vmatpush1.xpose.msra.mxu0 %v250
    %394 = vmatprep.subr.mxu0 %v254
    %395 = vmatpush1.xpose.msra.mxu0 %v253
    %396 = vmatprep.subr.mxu0 %v257
    %397 = vmatpush1.xpose.msra.mxu0 %v256
    %398 = vmatprep.subr.mxu0 %v260
    %399 = vmatpush1.xpose.msra.mxu0 %v259
    %400 = vmatprep.subr.mxu0 %v263
    %401 = vmatpush1.xpose.msra.mxu0 %v262
    %402 = vmatprep.subr.mxu0 %v266
    %403 = vmatpush1.xpose.msra.mxu0 %v265
    %404 = vmatprep.subr.mxu0 %v269
    %405 = vmatpush1.xpose.msra.mxu0 %v268
    %406 = vmatprep.subr.mxu0 %v272
    %407 = vmatpush1.xpose.msra.mxu0 %v271
    %408 = vmatprep.subr.mxu0 %v275
    %409 = vmatpush1.xpose.msra.mxu0 %v274
    %410 = vmatprep.subr.mxu0 %v278
    %411 = vmatpush1.xpose.msra.mxu0 %v277
    %412 = vmatprep.subr.mxu0 %v281
    %413 = vmatpush1.xpose.msra.mxu0 %v280
    %414 = vmatprep.subr.mxu0 %v284
    %415 = vmatpush1.xpose.msra.mxu0 %v283
    %416 = vmatprep.subr.mxu0 %v287
    %417 = vmatpush1.xpose.msra.mxu0 %v286
    %418 = vmatprep.mubr.f32.mxu0 %v44
    %419 = vmatmul.mubr.f32.gmra.mrb[0].mxu0 %v43
    %v420 = vpop.f32.mrb[0].mxu0
    %v421 = vadd.f32 %v342, %v420
    %v422 = vpop.f32.mrb[0].mxu0
    %v423 = vadd.f32 %v346, %v422
    %424 = vmatprep.mubr.f32.mxu0 %v47
    %425 = vmatmul.mubr.f32.gmra.mrb[0].mxu0 %v46
    %v426 = vpop.f32.mrb[0].mxu0
    %v427 = vadd.f32 %v342, %v426
    %v428 = vpop.f32.mrb[0].mxu0
    %v429 = vadd.f32 %v346, %v428
    %430 = vmatprep.mubr.f32.mxu0 %v50
    %431 = vmatmul.mubr.f32.gmra.mrb[0].mxu0 %v49
    %v432 = vpop.f32.mrb[0].mxu0
    %v433 = vadd.f32 %v342, %v432
    %v434 = vpop.f32.mrb[0].mxu0
    %v435 = vadd.f32 %v346, %v434
    %436 = vmatprep.mubr.f32.mxu0 %v53
    %437 = vmatmul.mubr.f32.gmra.mrb[0].mxu0 %v52
    %v438 = vpop.f32.mrb[0].mxu0
    %v439 = vadd.f32 %v342, %v438
    %v440 = vpop.f32.mrb[0].mxu0
    %v441 = vadd.f32 %v346, %v440
    %442 = vmatprep.mubr.f32.mxu0 %v56
    %443 = vmatmul.mubr.f32.gmra.mrb[0].mxu0 %v55
    %v444 = vpop.f32.mrb[0].mxu0
    %v445 = vadd.f32 %v342, %v444
    %v446 = vpop.f32.mrb[0].mxu0
    %v447 = vadd.f32 %v346, %v446
    %448 = vmatprep.mubr.f32.mxu0 %v59
    %449 = vmatmul.mubr.f32.gmra.mrb[0].mxu0 %v58
    %v450 = vpop.f32.mrb[0].mxu0
    %v451 = vadd.f32 %v342, %v450
    %v452 = vpop.f32.mrb[0].mxu0
    %v453 = vadd.f32 %v346, %v452
    %454 = vmatprep.mubr.f32.mxu0 %v62
    %455 = vmatmul.mubr.f32.gmra.mrb[0].mxu0 %v61
    %v456 = vpop.f32.mrb[0].mxu0
    %v457 = vadd.f32 %v342, %v456
    %v458 = vpop.f32.mrb[0].mxu0
    %v459 = vadd.f32 %v346, %v458
    %460 = vmatprep.mubr.f32.mxu0 %v65
    %461 = vmatmul.mubr.f32.gmra.mrb[0].mxu0 %v64
    %v462 = vpop.f32.mrb[0].mxu0
    %v463 = vadd.f32 %v342, %v462
    %v464 = vpop.f32.mrb[0].mxu0
    %v465 = vadd.f32 %v346, %v464
    %466 = vmatprep.mubr.f32.mxu0 %v68
    %467 = vmatmul.mubr.f32.gmra.mrb[0].mxu0 %v67
    %v468 = vpop.f32.mrb[0].mxu0
    %v469 = vadd.f32 %v342, %v468
    %v470 = vpop.f32.mrb[0].mxu0
    %v471 = vadd.f32 %v346, %v470
    %472 = vmatprep.mubr.f32.mxu0 %v71
    %473 = vmatmul.mubr.f32.gmra.mrb[0].mxu0 %v70
    %v474 = vpop.f32.mrb[0].mxu0
    %v475 = vadd.f32 %v342, %v474
    %v476 = vpop.f32.mrb[0].mxu0
    %v477 = vadd.f32 %v346, %v476
    %478 = vmatprep.mubr.f32.mxu0 %v74
    %479 = vmatmul.mubr.f32.gmra.mrb[0].mxu0 %v73
    %v480 = vpop.f32.mrb[0].mxu0
    %v481 = vadd.f32 %v342, %v480
    %v482 = vpop.f32.mrb[0].mxu0
    %v483 = vadd.f32 %v346, %v482
    %484 = vmatprep.mubr.f32.mxu0 %v77
    %485 = vmatmul.mubr.f32.gmra.mrb[0].mxu0 %v76
    %v486 = vpop.f32.mrb[0].mxu0
    %v487 = vadd.f32 %v342, %v486
    %v488 = vpop.f32.mrb[0].mxu0
    %v489 = vadd.f32 %v346, %v488
    %490 = vmatprep.mubr.f32.mxu0 %v80
    %491 = vmatmul.mubr.f32.gmra.mrb[0].mxu0 %v79
    %v492 = vpop.f32.mrb[0].mxu0
    %v493 = vadd.f32 %v342, %v492
    %v494 = vpop.f32.mrb[0].mxu0
    %v495 = vadd.f32 %v346, %v494
    %496 = vmatprep.mubr.f32.mxu0 %v83
    %497 = vmatmul.mubr.f32.gmra.mrb[0].mxu0 %v82
    %v498 = vpop.f32.mrb[0].mxu0
    %v499 = vadd.f32 %v342, %v498
    %v500 = vpop.f32.mrb[0].mxu0
    %v501 = vadd.f32 %v346, %v500
    %502 = vmatprep.mubr.f32.mxu0 %v86
    %503 = vmatmul.mubr.f32.gmra.mrb[0].mxu0 %v85
    %v504 = vpop.f32.mrb[0].mxu0
    %v505 = vadd.f32 %v342, %v504
    %v506 = vpop.f32.mrb[0].mxu0
    %v507 = vadd.f32 %v346, %v506
    %508 = vmatprep.mubr.f32.mxu0 %v89
    %509 = vmatmul.mubr.f32.gmra.mrb[0].mxu0 %v88
    %v510 = vpop.f32.mrb[0].mxu0
    %v511 = vadd.f32 %v342, %v510
    %v512 = vpop.f32.mrb[0].mxu0
    %v513 = vadd.f32 %v346, %v512
    %514 = vmatprep.mubr.f32.mxu0 %v92
    %515 = vmatmul.mubr.f32.gmra.mrb[0].mxu0 %v91
    %v516 = vpop.f32.mrb[0].mxu0
    %v517 = vadd.f32 %v342, %v516
    %v518 = vpop.f32.mrb[0].mxu0
    %v519 = vadd.f32 %v346, %v518
    %520 = vmatprep.mubr.f32.mxu0 %v95
    %521 = vmatmul.mubr.f32.gmra.mrb[0].mxu0 %v94
    %v522 = vpop.f32.mrb[0].mxu0
    %v523 = vadd.f32 %v342, %v522
    %v524 = vpop.f32.mrb[0].mxu0
    %v525 = vadd.f32 %v346, %v524
    %526 = vmatprep.mubr.f32.mxu0 %v98
    %527 = vmatmul.mubr.f32.gmra.mrb[0].mxu0 %v97
    %v528 = vpop.f32.mrb[0].mxu0
    %v529 = vadd.f32 %v342, %v528
    %v530 = vpop.f32.mrb[0].mxu0
    %v531 = vadd.f32 %v346, %v530
    %532 = vmatprep.mubr.f32.mxu0 %v101
    %533 = vmatmul.mubr.f32.gmra.mrb[0].mxu0 %v100
    %v534 = vpop.f32.mrb[0].mxu0
    %v535 = vadd.f32 %v342, %v534
    %v536 = vpop.f32.mrb[0].mxu0
    %v537 = vadd.f32 %v346, %v536
    %538 = vmatprep.mubr.f32.mxu0 %v104
    %539 = vmatmul.mubr.f32.gmra.mrb[0].mxu0 %v103
    %v540 = vpop.f32.mrb[0].mxu0
    %v541 = vadd.f32 %v342, %v540
    %v542 = vpop.f32.mrb[0].mxu0
    %v543 = vadd.f32 %v346, %v542
    %544 = vmatprep.mubr.f32.mxu0 %v107
    %545 = vmatmul.mubr.f32.gmra.mrb[0].mxu0 %v106
    %v546 = vpop.f32.mrb[0].mxu0
    %v547 = vadd.f32 %v342, %v546
    %v548 = vpop.f32.mrb[0].mxu0
    %v549 = vadd.f32 %v346, %v548
    %550 = vmatprep.mubr.f32.mxu0 %v110
    %551 = vmatmul.mubr.f32.gmra.mrb[0].mxu0 %v109
    %v552 = vpop.f32.mrb[0].mxu0
    %v553 = vadd.f32 %v342, %v552
    %v554 = vpop.f32.mrb[0].mxu0
    %v555 = vadd.f32 %v346, %v554
    %556 = vmatprep.mubr.f32.mxu0 %v113
    %557 = vmatmul.mubr.f32.gmra.mrb[0].mxu0 %v112
    %v558 = vpop.f32.mrb[0].mxu0
    %v559 = vadd.f32 %v342, %v558
    %v560 = vpop.f32.mrb[0].mxu0
    %v561 = vadd.f32 %v346, %v560
    %562 = vmatprep.mubr.f32.mxu0 %v116
    %563 = vmatmul.mubr.f32.gmra.mrb[0].mxu0 %v115
    %v564 = vpop.f32.mrb[0].mxu0
    %v565 = vadd.f32 %v342, %v564
    %v566 = vpop.f32.mrb[0].mxu0
    %v567 = vadd.f32 %v346, %v566
    %568 = vmatprep.mubr.f32.mxu0 %v119
    %569 = vmatmul.mubr.f32.gmra.mrb[0].mxu0 %v118
    %v570 = vpop.f32.mrb[0].mxu0
    %v571 = vadd.f32 %v342, %v570
    %v572 = vpop.f32.mrb[0].mxu0
    %v573 = vadd.f32 %v346, %v572
    %574 = vmatprep.mubr.f32.mxu0 %v122
    %575 = vmatmul.mubr.f32.gmra.mrb[0].mxu0 %v121
    %v576 = vpop.f32.mrb[0].mxu0
    %v577 = vadd.f32 %v342, %v576
    %v578 = vpop.f32.mrb[0].mxu0
    %v579 = vadd.f32 %v346, %v578
    %580 = vmatprep.mubr.f32.mxu0 %v125
    %581 = vmatmul.mubr.f32.gmra.mrb[0].mxu0 %v124
    %v582 = vpop.f32.mrb[0].mxu0
    %v583 = vadd.f32 %v342, %v582
    %v584 = vpop.f32.mrb[0].mxu0
    %v585 = vadd.f32 %v346, %v584
    %586 = vmatprep.mubr.f32.mxu0 %v128
    %587 = vmatmul.mubr.f32.gmra.mrb[0].mxu0 %v127
    %v588 = vpop.f32.mrb[0].mxu0
    %v589 = vadd.f32 %v342, %v588
    %v590 = vpop.f32.mrb[0].mxu0
    %v591 = vadd.f32 %v346, %v590
    %592 = vmatprep.mubr.f32.mxu0 %v131
    %593 = vmatmul.mubr.f32.gmra.mrb[0].mxu0 %v130
    %v594 = vpop.f32.mrb[0].mxu0
    %v595 = vadd.f32 %v342, %v594
    %v596 = vpop.f32.mrb[0].mxu0
    %v597 = vadd.f32 %v346, %v596
    %598 = vmatprep.mubr.f32.mxu0 %v134
    %599 = vmatmul.mubr.f32.gmra.mrb[0].mxu0 %v133
    %v600 = vpop.f32.mrb[0].mxu0
    %v601 = vadd.f32 %v342, %v600
    %v602 = vpop.f32.mrb[0].mxu0
    %v603 = vadd.f32 %v346, %v602
    %604 = vmatprep.mubr.f32.mxu0 %v137
    %605 = vmatmul.mubr.f32.gmra.mrb[0].mxu0 %v136
    %v606 = vpop.f32.mrb[0].mxu0
    %v607 = vadd.f32 %v342, %v606
    %v608 = vpop.f32.mrb[0].mxu0
    %v609 = vadd.f32 %v346, %v608
    %610 = vmatprep.mubr.f32.mxu0 %v140
    %611 = vmatmul.mubr.f32.gmra.mrb[0].mxu0 %v139
    %v612 = vpop.f32.mrb[0].mxu0
    %v613 = vadd.f32 %v342, %v612
    %v614 = vpop.f32.mrb[0].mxu0
    %v615 = vadd.f32 %v346, %v614
    %616 = vmatprep.mubr.f32.mxu0 %v143
    %617 = vmatmul.mubr.f32.gmra.mrb[0].mxu0 %v142
    %v618 = vpop.f32.mrb[0].mxu0
    %v619 = vadd.f32 %v342, %v618
    %v620 = vpop.f32.mrb[0].mxu0
    %v621 = vadd.f32 %v346, %v620
    %622 = vmatprep.mubr.f32.mxu0 %v146
    %623 = vmatmul.mubr.f32.gmra.mrb[0].mxu0 %v145
    %v624 = vpop.f32.mrb[0].mxu0
    %v625 = vadd.f32 %v342, %v624
    %v626 = vpop.f32.mrb[0].mxu0
    %v627 = vadd.f32 %v346, %v626
    %628 = vmatprep.mubr.f32.mxu0 %v149
    %629 = vmatmul.mubr.f32.gmra.mrb[0].mxu0 %v148
    %v630 = vpop.f32.mrb[0].mxu0
    %v631 = vadd.f32 %v342, %v630
    %v632 = vpop.f32.mrb[0].mxu0
    %v633 = vadd.f32 %v346, %v632
    %634 = vmatprep.mubr.f32.mxu0 %v152
    %635 = vmatmul.mubr.f32.gmra.mrb[0].mxu0 %v151
    %v636 = vpop.f32.mrb[0].mxu0
    %v637 = vadd.f32 %v342, %v636
    %v638 = vpop.f32.mrb[0].mxu0
    %v639 = vadd.f32 %v346, %v638
    %640 = vmatprep.mubr.f32.mxu0 %v155
    %641 = vmatmul.mubr.f32.gmra.mrb[0].mxu0 %v154
    %v642 = vpop.f32.mrb[0].mxu0
    %v643 = vadd.f32 %v342, %v642
    %v644 = vpop.f32.mrb[0].mxu0
    %v645 = vadd.f32 %v346, %v644
    %646 = vmatprep.mubr.f32.mxu0 %v158
    %647 = vmatmul.mubr.f32.gmra.mrb[0].mxu0 %v157
    %v648 = vpop.f32.mrb[0].mxu0
    %v649 = vadd.f32 %v342, %v648
    %v650 = vpop.f32.mrb[0].mxu0
    %v651 = vadd.f32 %v346, %v650
    %652 = vmatprep.mubr.f32.mxu0 %v161
    %653 = vmatmul.mubr.f32.gmra.mrb[0].mxu0 %v160
    %v654 = vpop.f32.mrb[0].mxu0
    %v655 = vadd.f32 %v342, %v654
    %v656 = vpop.f32.mrb[0].mxu0
    %v657 = vadd.f32 %v346, %v656
    %658 = vmatprep.mubr.f32.mxu0 %v164
    %659 = vmatmul.mubr.f32.gmra.mrb[0].mxu0 %v163
    %v660 = vpop.f32.mrb[0].mxu0
    %v661 = vadd.f32 %v342, %v660
    %v662 = vpop.f32.mrb[0].mxu0
    %v663 = vadd.f32 %v346, %v662
    %664 = vmatprep.mubr.f32.mxu0 %v167
    %665 = vmatmul.mubr.f32.gmra.mrb[0].mxu0 %v166
    %v666 = vpop.f32.mrb[0].mxu0
    %v667 = vadd.f32 %v342, %v666
    %v668 = vpop.f32.mrb[0].mxu0
    %v669 = vadd.f32 %v346, %v668
    %670 = vmatprep.mubr.f32.mxu0 %v170
    %671 = vmatmul.mubr.f32.gmra.mrb[0].mxu0 %v169
    %v672 = vpop.f32.mrb[0].mxu0
    %v673 = vadd.f32 %v342, %v672
    %v674 = vpop.f32.mrb[0].mxu0
    %v675 = vadd.f32 %v346, %v674
    %676 = vmatprep.mubr.f32.mxu0 %v173
    %677 = vmatmul.mubr.f32.gmra.mrb[0].mxu0 %v172
    %v678 = vpop.f32.mrb[0].mxu0
    %v679 = vadd.f32 %v342, %v678
    %v680 = vpop.f32.mrb[0].mxu0
    %v681 = vadd.f32 %v346, %v680
    %682 = vmatprep.mubr.f32.mxu0 %v176
    %683 = vmatmul.mubr.f32.gmra.mrb[0].mxu0 %v175
    %v684 = vpop.f32.mrb[0].mxu0
    %v685 = vadd.f32 %v342, %v684
    %v686 = vpop.f32.mrb[0].mxu0
    %v687 = vadd.f32 %v346, %v686
    %688 = vmatprep.mubr.f32.mxu0 %v179
    %689 = vmatmul.mubr.f32.gmra.mrb[0].mxu0 %v178
    %v690 = vpop.f32.mrb[0].mxu0
    %v691 = vadd.f32 %v342, %v690
    %v692 = vpop.f32.mrb[0].mxu0
    %v693 = vadd.f32 %v346, %v692
    %694 = vmatprep.mubr.f32.mxu0 %v182
    %695 = vmatmul.mubr.f32.gmra.mrb[0].mxu0 %v181
    %v696 = vpop.f32.mrb[0].mxu0
    %v697 = vadd.f32 %v342, %v696
    %v698 = vpop.f32.mrb[0].mxu0
    %v699 = vadd.f32 %v346, %v698
    %700 = vmatprep.mubr.f32.mxu0 %v185
    %701 = vmatmul.mubr.f32.gmra.mrb[0].mxu0 %v184
    %v702 = vpop.f32.mrb[0].mxu0
    %v703 = vadd.f32 %v342, %v702
    %v704 = vpop.f32.mrb[0].mxu0
    %v705 = vadd.f32 %v346, %v704
    %706 = vmatprep.mubr.f32.mxu0 %v188
    %707 = vmatmul.mubr.f32.gmra.mrb[0].mxu0 %v187
    %v708 = vpop.f32.mrb[0].mxu0
    %v709 = vadd.f32 %v342, %v708
    %v710 = vpop.f32.mrb[0].mxu0
    %v711 = vadd.f32 %v346, %v710
    %712 = vmatprep.mubr.f32.mxu0 %v191
    %713 = vmatmul.mubr.f32.gmra.mrb[0].mxu0 %v190
    %v714 = vpop.f32.mrb[0].mxu0
    %v715 = vadd.f32 %v342, %v714
    %v716 = vpop.f32.mrb[0].mxu0
    %v717 = vadd.f32 %v346, %v716
    %718 = vdwg.mxu0
    %719 = vmatprep.subr.mxu0 0.0
    %720 = vmatpush1.xpose.msra.mxu0 %v195
    %721 = vmatprep.subr.mxu0 0.0
    %722 = vmatpush1.xpose.msra.mxu0 %v198
    %723 = vmatprep.subr.mxu0 0.0
    %724 = vmatpush1.xpose.msra.mxu0 %v201
    %725 = vmatprep.subr.mxu0 0.0
    %726 = vmatpush1.xpose.msra.mxu0 %v204
    %727 = vmatprep.subr.mxu0 0.0
    %728 = vmatpush1.xpose.msra.mxu0 %v207
    %729 = vmatprep.subr.mxu0 0.0
    %730 = vmatpush1.xpose.msra.mxu0 %v210
    %731 = vmatprep.subr.mxu0 0.0
    %732 = vmatpush1.xpose.msra.mxu0 %v213
    %733 = vmatprep.subr.mxu0 0.0
    %734 = vmatpush1.xpose.msra.mxu0 %v216
    %735 = vmatprep.subr.mxu0 0.0
    %736 = vmatpush1.xpose.msra.mxu0 %v219
    %737 = vmatprep.subr.mxu0 0.0
    %738 = vmatpush1.xpose.msra.mxu0 %v222
    %739 = vmatprep.subr.mxu0 0.0
    %740 = vmatpush1.xpose.msra.mxu0 %v225
    %741 = vmatprep.subr.mxu0 0.0
    %742 = vmatpush1.xpose.msra.mxu0 %v228
    %743 = vmatprep.subr.mxu0 0.0
    %744 = vmatpush1.xpose.msra.mxu0 %v231
    %745 = vmatprep.subr.mxu0 0.0
    %746 = vmatpush1.xpose.msra.mxu0 %v234
    %747 = vmatprep.subr.mxu0 0.0
    %748 = vmatpush1.xpose.msra.mxu0 %v237
    %749 = vmatprep.subr.mxu0 0.0
    %750 = vmatpush1.xpose.msra.mxu0 %v240
    %751 = vmatprep.subr.mxu0 0.0
    %752 = vmatpush1.xpose.msra.mxu0 %v243
    %753 = vmatprep.subr.mxu0 0.0
    %754 = vmatpush1.xpose.msra.mxu0 %v246
    %755 = vmatprep.subr.mxu0 0.0
    %756 = vmatpush1.xpose.msra.mxu0 %v249
    %757 = vmatprep.subr.mxu0 0.0
    %758 = vmatpush1.xpose.msra.mxu0 %v252
    %759 = vmatprep.subr.mxu0 0.0
    %760 = vmatpush1.xpose.msra.mxu0 %v255
    %761 = vmatprep.subr.mxu0 0.0
    %762 = vmatpush1.xpose.msra.mxu0 %v258
    %763 = vmatprep.subr.mxu0 0.0
    %764 = vmatpush1.xpose.msra.mxu0 %v261
    %765 = vmatprep.subr.mxu0 0.0
    %766 = vmatpush1.xpose.msra.mxu0 %v264
    %767 = vmatprep.subr.mxu0 0.0
    %768 = vmatpush1.xpose.msra.mxu0 %v267
    %769 = vmatprep.subr.mxu0 0.0
    %770 = vmatpush1.xpose.msra.mxu0 %v270
    %771 = vmatprep.subr.mxu0 0.0
    %772 = vmatpush1.xpose.msra.mxu0 %v273
    %773 = vmatprep.subr.mxu0 0.0
    %774 = vmatpush1.xpose.msra.mxu0 %v276
    %775 = vmatprep.subr.mxu0 0.0
    %776 = vmatpush1.xpose.msra.mxu0 %v279
    %777 = vmatprep.subr.mxu0 0.0
    %778 = vmatpush1.xpose.msra.mxu0 %v282
    %779 = vmatprep.subr.mxu0 0.0
    %780 = vmatpush1.xpose.msra.mxu0 %v285
    %781 = vmatprep.subr.mxu0 0.0
    %782 = vmatpush1.xpose.msra.mxu0 %v288
    %783 = vmatprep.mubr.f32.mxu0 0.0
    %784 = vmatmul.mubr.f32.gmra.mrb[0].mxu0 %v45
    %v785 = vpop.f32.mrb[0].mxu0
    %v786 = vadd.f32 %v421, %v785
    %v787 = vpop.f32.mrb[0].mxu0
    %v788 = vadd.f32 %v423, %v787
    %789 = vmatprep.mubr.f32.mxu0 0.0
    %790 = vmatmul.mubr.f32.gmra.mrb[0].mxu0 %v48
    %v791 = vpop.f32.mrb[0].mxu0
    %v792 = vadd.f32 %v427, %v791
    %v793 = vpop.f32.mrb[0].mxu0
    %v794 = vadd.f32 %v429, %v793
    %795 = vmatprep.mubr.f32.mxu0 0.0
    %796 = vmatmul.mubr.f32.gmra.mrb[0].mxu0 %v51
    %v797 = vpop.f32.mrb[0].mxu0
    %v798 = vadd.f32 %v433, %v797
    %v799 = vpop.f32.mrb[0].mxu0
    %v800 = vadd.f32 %v435, %v799
    %801 = vmatprep.mubr.f32.mxu0 0.0
    %802 = vmatmul.mubr.f32.gmra.mrb[0].mxu0 %v54
    %v803 = vpop.f32.mrb[0].mxu0
    %v804 = vadd.f32 %v439, %v803
    %v805 = vpop.f32.mrb[0].mxu0
    %v806 = vadd.f32 %v441, %v805
    %807 = vmatprep.mubr.f32.mxu0 0.0
    %808 = vmatmul.mubr.f32.gmra.mrb[0].mxu0 %v57
    %v809 = vpop.f32.mrb[0].mxu0
    %v810 = vadd.f32 %v445, %v809
    %v811 = vpop.f32.mrb[0].mxu0
    %v812 = vadd.f32 %v447, %v811
    %813 = vmatprep.mubr.f32.mxu0 0.0
    %814 = vmatmul.mubr.f32.gmra.mrb[0].mxu0 %v60
    %v815 = vpop.f32.mrb[0].mxu0
    %v816 = vadd.f32 %v451, %v815
    %v817 = vpop.f32.mrb[0].mxu0
    %v818 = vadd.f32 %v453, %v817
    %819 = vmatprep.mubr.f32.mxu0 0.0
    %820 = vmatmul.mubr.f32.gmra.mrb[0].mxu0 %v63
    %v821 = vpop.f32.mrb[0].mxu0
    %v822 = vadd.f32 %v457, %v821
    %v823 = vpop.f32.mrb[0].mxu0
    %v824 = vadd.f32 %v459, %v823
    %825 = vmatprep.mubr.f32.mxu0 0.0
    %826 = vmatmul.mubr.f32.gmra.mrb[0].mxu0 %v66
    %v827 = vpop.f32.mrb[0].mxu0
    %v828 = vadd.f32 %v463, %v827
    %v829 = vpop.f32.mrb[0].mxu0
    %v830 = vadd.f32 %v465, %v829
    %831 = vmatprep.mubr.f32.mxu0 0.0
    %832 = vmatmul.mubr.f32.gmra.mrb[0].mxu0 %v69
    %v833 = vpop.f32.mrb[0].mxu0
    %v834 = vadd.f32 %v469, %v833
    %v835 = vpop.f32.mrb[0].mxu0
    %v836 = vadd.f32 %v471, %v835
    %837 = vmatprep.mubr.f32.mxu0 0.0
    %838 = vmatmul.mubr.f32.gmra.mrb[0].mxu0 %v72
    %v839 = vpop.f32.mrb[0].mxu0
    %v840 = vadd.f32 %v475, %v839
    %v841 = vpop.f32.mrb[0].mxu0
    %v842 = vadd.f32 %v477, %v841
    %843 = vmatprep.mubr.f32.mxu0 0.0
    %844 = vmatmul.mubr.f32.gmra.mrb[0].mxu0 %v75
    %v845 = vpop.f32.mrb[0].mxu0
    %v846 = vadd.f32 %v481, %v845
    %v847 = vpop.f32.mrb[0].mxu0
    %v848 = vadd.f32 %v483, %v847
    %849 = vmatprep.mubr.f32.mxu0 0.0
    %850 = vmatmul.mubr.f32.gmra.mrb[0].mxu0 %v78
    %v851 = vpop.f32.mrb[0].mxu0
    %v852 = vadd.f32 %v487, %v851
    %v853 = vpop.f32.mrb[0].mxu0
    %v854 = vadd.f32 %v489, %v853
    %855 = vmatprep.mubr.f32.mxu0 0.0
    %856 = vmatmul.mubr.f32.gmra.mrb[0].mxu0 %v81
    %v857 = vpop.f32.mrb[0].mxu0
    %v858 = vadd.f32 %v493, %v857
    %v859 = vpop.f32.mrb[0].mxu0
    %v860 = vadd.f32 %v495, %v859
    %861 = vmatprep.mubr.f32.mxu0 0.0
    %862 = vmatmul.mubr.f32.gmra.mrb[0].mxu0 %v84
    %v863 = vpop.f32.mrb[0].mxu0
    %v864 = vadd.f32 %v499, %v863
    %v865 = vpop.f32.mrb[0].mxu0
    %v866 = vadd.f32 %v501, %v865
    %867 = vmatprep.mubr.f32.mxu0 0.0
    %868 = vmatmul.mubr.f32.gmra.mrb[0].mxu0 %v87
    %v869 = vpop.f32.mrb[0].mxu0
    %v870 = vadd.f32 %v505, %v869
    %v871 = vpop.f32.mrb[0].mxu0
    %v872 = vadd.f32 %v507, %v871
    %873 = vmatprep.mubr.f32.mxu0 0.0
    %874 = vmatmul.mubr.f32.gmra.mrb[0].mxu0 %v90
    %v875 = vpop.f32.mrb[0].mxu0
    %v876 = vadd.f32 %v511, %v875
    %v877 = vpop.f32.mrb[0].mxu0
    %v878 = vadd.f32 %v513, %v877
    %879 = vmatprep.mubr.f32.mxu0 0.0
    %880 = vmatmul.mubr.f32.gmra.mrb[0].mxu0 %v93
    %v881 = vpop.f32.mrb[0].mxu0
    %v882 = vadd.f32 %v517, %v881
    %v883 = vpop.f32.mrb[0].mxu0
    %v884 = vadd.f32 %v519, %v883
    %885 = vmatprep.mubr.f32.mxu0 0.0
    %886 = vmatmul.mubr.f32.gmra.mrb[0].mxu0 %v96
    %v887 = vpop.f32.mrb[0].mxu0
    %v888 = vadd.f32 %v523, %v887
    %v889 = vpop.f32.mrb[0].mxu0
    %v890 = vadd.f32 %v525, %v889
    %891 = vmatprep.mubr.f32.mxu0 0.0
    %892 = vmatmul.mubr.f32.gmra.mrb[0].mxu0 %v99
    %v893 = vpop.f32.mrb[0].mxu0
    %v894 = vadd.f32 %v529, %v893
    %v895 = vpop.f32.mrb[0].mxu0
    %v896 = vadd.f32 %v531, %v895
    %897 = vmatprep.mubr.f32.mxu0 0.0
    %898 = vmatmul.mubr.f32.gmra.mrb[0].mxu0 %v102
    %v899 = vpop.f32.mrb[0].mxu0
    %v900 = vadd.f32 %v535, %v899
    %v901 = vpop.f32.mrb[0].mxu0
    %v902 = vadd.f32 %v537, %v901
    %903 = vmatprep.mubr.f32.mxu0 0.0
    %904 = vmatmul.mubr.f32.gmra.mrb[0].mxu0 %v105
    %v905 = vpop.f32.mrb[0].mxu0
    %v906 = vadd.f32 %v541, %v905
    %v907 = vpop.f32.mrb[0].mxu0
    %v908 = vadd.f32 %v543, %v907
    %909 = vmatprep.mubr.f32.mxu0 0.0
    %910 = vmatmul.mubr.f32.gmra.mrb[0].mxu0 %v108
    %v911 = vpop.f32.mrb[0].mxu0
    %v912 = vadd.f32 %v547, %v911
    %v913 = vpop.f32.mrb[0].mxu0
    %v914 = vadd.f32 %v549, %v913
    %915 = vmatprep.mubr.f32.mxu0 0.0
    %916 = vmatmul.mubr.f32.gmra.mrb[0].mxu0 %v111
    %v917 = vpop.f32.mrb[0].mxu0
    %v918 = vadd.f32 %v553, %v917
    %v919 = vpop.f32.mrb[0].mxu0
    %v920 = vadd.f32 %v555, %v919
    %921 = vmatprep.mubr.f32.mxu0 0.0
    %922 = vmatmul.mubr.f32.gmra.mrb[0].mxu0 %v114
    %v923 = vpop.f32.mrb[0].mxu0
    %v924 = vadd.f32 %v559, %v923
    %v925 = vpop.f32.mrb[0].mxu0
    %v926 = vadd.f32 %v561, %v925
    %927 = vmatprep.mubr.f32.mxu0 0.0
    %928 = vmatmul.mubr.f32.gmra.mrb[0].mxu0 %v117
    %v929 = vpop.f32.mrb[0].mxu0
    %v930 = vadd.f32 %v565, %v929
    %v931 = vpop.f32.mrb[0].mxu0
    %v932 = vadd.f32 %v567, %v931
    %933 = vmatprep.mubr.f32.mxu0 0.0
    %934 = vmatmul.mubr.f32.gmra.mrb[0].mxu0 %v120
    %v935 = vpop.f32.mrb[0].mxu0
    %v936 = vadd.f32 %v571, %v935
    %v937 = vpop.f32.mrb[0].mxu0
    %v938 = vadd.f32 %v573, %v937
    %939 = vmatprep.mubr.f32.mxu0 0.0
    %940 = vmatmul.mubr.f32.gmra.mrb[0].mxu0 %v123
    %v941 = vpop.f32.mrb[0].mxu0
    %v942 = vadd.f32 %v577, %v941
    %v943 = vpop.f32.mrb[0].mxu0
    %v944 = vadd.f32 %v579, %v943
    %945 = vmatprep.mubr.f32.mxu0 0.0
    %946 = vmatmul.mubr.f32.gmra.mrb[0].mxu0 %v126
    %v947 = vpop.f32.mrb[0].mxu0
    %v948 = vadd.f32 %v583, %v947
    %v949 = vpop.f32.mrb[0].mxu0
    %v950 = vadd.f32 %v585, %v949
    %951 = vmatprep.mubr.f32.mxu0 0.0
    %952 = vmatmul.mubr.f32.gmra.mrb[0].mxu0 %v129
    %v953 = vpop.f32.mrb[0].mxu0
    %v954 = vadd.f32 %v589, %v953
    %v955 = vpop.f32.mrb[0].mxu0
    %v956 = vadd.f32 %v591, %v955
    %957 = vmatprep.mubr.f32.mxu0 0.0
    %958 = vmatmul.mubr.f32.gmra.mrb[0].mxu0 %v132
    %v959 = vpop.f32.mrb[0].mxu0
    %v960 = vadd.f32 %v595, %v959
    %v961 = vpop.f32.mrb[0].mxu0
    %v962 = vadd.f32 %v597, %v961
    %963 = vmatprep.mubr.f32.mxu0 0.0
    %964 = vmatmul.mubr.f32.gmra.mrb[0].mxu0 %v135
    %v965 = vpop.f32.mrb[0].mxu0
    %v966 = vadd.f32 %v601, %v965
    %v967 = vpop.f32.mrb[0].mxu0
    %v968 = vadd.f32 %v603, %v967
    %969 = vmatprep.mubr.f32.mxu0 0.0
    %970 = vmatmul.mubr.f32.gmra.mrb[0].mxu0 %v138
    %v971 = vpop.f32.mrb[0].mxu0
    %v972 = vadd.f32 %v607, %v971
    %v973 = vpop.f32.mrb[0].mxu0
    %v974 = vadd.f32 %v609, %v973
    %975 = vmatprep.mubr.f32.mxu0 0.0
    %976 = vmatmul.mubr.f32.gmra.mrb[0].mxu0 %v141
    %v977 = vpop.f32.mrb[0].mxu0
    %v978 = vadd.f32 %v613, %v977
    %v979 = vpop.f32.mrb[0].mxu0
    %v980 = vadd.f32 %v615, %v979
    %981 = vmatprep.mubr.f32.mxu0 0.0
    %982 = vmatmul.mubr.f32.gmra.mrb[0].mxu0 %v144
    %v983 = vpop.f32.mrb[0].mxu0
    %v984 = vadd.f32 %v619, %v983
    %v985 = vpop.f32.mrb[0].mxu0
    %v986 = vadd.f32 %v621, %v985
    %987 = vmatprep.mubr.f32.mxu0 0.0
    %988 = vmatmul.mubr.f32.gmra.mrb[0].mxu0 %v147
    %v989 = vpop.f32.mrb[0].mxu0
    %v990 = vadd.f32 %v625, %v989
    %v991 = vpop.f32.mrb[0].mxu0
    %v992 = vadd.f32 %v627, %v991
    %993 = vmatprep.mubr.f32.mxu0 0.0
    %994 = vmatmul.mubr.f32.gmra.mrb[0].mxu0 %v150
    %v995 = vpop.f32.mrb[0].mxu0
    %v996 = vadd.f32 %v631, %v995
    %v997 = vpop.f32.mrb[0].mxu0
    %v998 = vadd.f32 %v633, %v997
    %999 = vmatprep.mubr.f32.mxu0 0.0
    %1000 = vmatmul.mubr.f32.gmra.mrb[0].mxu0 %v153
    %v1001 = vpop.f32.mrb[0].mxu0
    %v1002 = vadd.f32 %v637, %v1001
    %v1003 = vpop.f32.mrb[0].mxu0
    %v1004 = vadd.f32 %v639, %v1003
    %1005 = vmatprep.mubr.f32.mxu0 0.0
    %1006 = vmatmul.mubr.f32.gmra.mrb[0].mxu0 %v156
    %v1007 = vpop.f32.mrb[0].mxu0
    %v1008 = vadd.f32 %v643, %v1007
    %v1009 = vpop.f32.mrb[0].mxu0
    %v1010 = vadd.f32 %v645, %v1009
    %1011 = vmatprep.mubr.f32.mxu0 0.0
    %1012 = vmatmul.mubr.f32.gmra.mrb[0].mxu0 %v159
    %v1013 = vpop.f32.mrb[0].mxu0
    %v1014 = vadd.f32 %v649, %v1013
    %v1015 = vpop.f32.mrb[0].mxu0
    %v1016 = vadd.f32 %v651, %v1015
    %1017 = vmatprep.mubr.f32.mxu0 0.0
    %1018 = vmatmul.mubr.f32.gmra.mrb[0].mxu0 %v162
    %v1019 = vpop.f32.mrb[0].mxu0
    %v1020 = vadd.f32 %v655, %v1019
    %v1021 = vpop.f32.mrb[0].mxu0
    %v1022 = vadd.f32 %v657, %v1021
    %1023 = vmatprep.mubr.f32.mxu0 0.0
    %1024 = vmatmul.mubr.f32.gmra.mrb[0].mxu0 %v165
    %v1025 = vpop.f32.mrb[0].mxu0
    %v1026 = vadd.f32 %v661, %v1025
    %v1027 = vpop.f32.mrb[0].mxu0
    %v1028 = vadd.f32 %v663, %v1027
    %1029 = vmatprep.mubr.f32.mxu0 0.0
    %1030 = vmatmul.mubr.f32.gmra.mrb[0].mxu0 %v168
    %v1031 = vpop.f32.mrb[0].mxu0
    %v1032 = vadd.f32 %v667, %v1031
    %v1033 = vpop.f32.mrb[0].mxu0
    %v1034 = vadd.f32 %v669, %v1033
    %1035 = vmatprep.mubr.f32.mxu0 0.0
    %1036 = vmatmul.mubr.f32.gmra.mrb[0].mxu0 %v171
    %v1037 = vpop.f32.mrb[0].mxu0
    %v1038 = vadd.f32 %v673, %v1037
    %v1039 = vpop.f32.mrb[0].mxu0
    %v1040 = vadd.f32 %v675, %v1039
    %1041 = vmatprep.mubr.f32.mxu0 0.0
    %1042 = vmatmul.mubr.f32.gmra.mrb[0].mxu0 %v174
    %v1043 = vpop.f32.mrb[0].mxu0
    %v1044 = vadd.f32 %v679, %v1043
    %v1045 = vpop.f32.mrb[0].mxu0
    %v1046 = vadd.f32 %v681, %v1045
    %1047 = vmatprep.mubr.f32.mxu0 0.0
    %1048 = vmatmul.mubr.f32.gmra.mrb[0].mxu0 %v177
    %v1049 = vpop.f32.mrb[0].mxu0
    %v1050 = vadd.f32 %v685, %v1049
    %v1051 = vpop.f32.mrb[0].mxu0
    %v1052 = vadd.f32 %v687, %v1051
    %1053 = vmatprep.mubr.f32.mxu0 0.0
    %1054 = vmatmul.mubr.f32.gmra.mrb[0].mxu0 %v180
    %v1055 = vpop.f32.mrb[0].mxu0
    %v1056 = vadd.f32 %v691, %v1055
    %v1057 = vpop.f32.mrb[0].mxu0
    %v1058 = vadd.f32 %v693, %v1057
    %1059 = vmatprep.mubr.f32.mxu0 0.0
    %1060 = vmatmul.mubr.f32.gmra.mrb[0].mxu0 %v183
    %v1061 = vpop.f32.mrb[0].mxu0
    %v1062 = vadd.f32 %v697, %v1061
    %v1063 = vpop.f32.mrb[0].mxu0
    %v1064 = vadd.f32 %v699, %v1063
    %1065 = vmatprep.mubr.f32.mxu0 0.0
    %1066 = vmatmul.mubr.f32.gmra.mrb[0].mxu0 %v186
    %v1067 = vpop.f32.mrb[0].mxu0
    %v1068 = vadd.f32 %v703, %v1067
    %v1069 = vpop.f32.mrb[0].mxu0
    %v1070 = vadd.f32 %v705, %v1069
    %1071 = vmatprep.mubr.f32.mxu0 0.0
    %1072 = vmatmul.mubr.f32.gmra.mrb[0].mxu0 %v189
    %v1073 = vpop.f32.mrb[0].mxu0
    %v1074 = vadd.f32 %v709, %v1073
    %v1075 = vpop.f32.mrb[0].mxu0
    %v1076 = vadd.f32 %v711, %v1075
    %1077 = vmatprep.mubr.f32.mxu0 0.0
    %1078 = vmatmul.mubr.f32.gmra.mrb[0].mxu0 %v192
    %v1079 = vpop.f32.mrb[0].mxu0
    %v1080 = vadd.f32 %v715, %v1079
    %v1081 = vpop.f32.mrb[0].mxu0
    %v1082 = vadd.f32 %v717, %v1081
    %1083 = vdwg.mxu0
    %1084 = vmatprep.subr.mxu0 %v290
    %1085 = vmatpush1.xpose.msra.mxu0 %v289
    %1086 = vmatprep.subr.mxu0 %v293
    %1087 = vmatpush1.xpose.msra.mxu0 %v292
    %1088 = vmatprep.subr.mxu0 %v296
    %1089 = vmatpush1.xpose.msra.mxu0 %v295
    %1090 = vmatprep.subr.mxu0 %v299
    %1091 = vmatpush1.xpose.msra.mxu0 %v298
    %1092 = vmatprep.subr.mxu0 %v302
    %1093 = vmatpush1.xpose.msra.mxu0 %v301
    %1094 = vmatprep.subr.mxu0 %v305
    %1095 = vmatpush1.xpose.msra.mxu0 %v304
    %1096 = vmatprep.subr.mxu0 %v308
    %1097 = vmatpush1.xpose.msra.mxu0 %v307
    %1098 = vmatprep.subr.mxu0 %v311
    %1099 = vmatpush1.xpose.msra.mxu0 %v310
    %1100 = vmatprep.subr.mxu0 %v314
    %1101 = vmatpush1.xpose.msra.mxu0 %v313
    %1102 = vmatprep.subr.mxu0 %v317
    %1103 = vmatpush1.xpose.msra.mxu0 %v316
    %1104 = vmatprep.subr.mxu0 %v320
    %1105 = vmatpush1.xpose.msra.mxu0 %v319
    %1106 = vmatprep.subr.mxu0 %v323
    %1107 = vmatpush1.xpose.msra.mxu0 %v322
    %1108 = vmatprep.subr.mxu0 %v326
    %1109 = vmatpush1.xpose.msra.mxu0 %v325
    %1110 = vmatprep.subr.mxu0 %v329
    %1111 = vmatpush1.xpose.msra.mxu0 %v328
    %1112 = vmatprep.subr.mxu0 %v332
    %1113 = vmatpush1.xpose.msra.mxu0 %v331
    %1114 = vmatprep.subr.mxu0 %v335
    %1115 = vmatpush1.xpose.msra.mxu0 %v334
    %1116 = vmatprep.subr.mxu0 0.0
    %1117 = vmatpush1.xpose.msra.mxu0 0.0
    %1118 = vmatprep.subr.mxu0 0.0
    %1119 = vmatpush1.xpose.msra.mxu0 0.0
    %1120 = vmatprep.subr.mxu0 0.0
    %1121 = vmatpush1.xpose.msra.mxu0 0.0
    %1122 = vmatprep.subr.mxu0 0.0
    %1123 = vmatpush1.xpose.msra.mxu0 0.0
    %1124 = vmatprep.subr.mxu0 0.0
    %1125 = vmatpush1.xpose.msra.mxu0 0.0
    %1126 = vmatprep.subr.mxu0 0.0
    %1127 = vmatpush1.xpose.msra.mxu0 0.0
    %1128 = vmatprep.subr.mxu0 0.0
    %1129 = vmatpush1.xpose.msra.mxu0 0.0
    %1130 = vmatprep.subr.mxu0 0.0
    %1131 = vmatpush1.xpose.msra.mxu0 0.0
    %1132 = vmatprep.subr.mxu0 0.0
    %1133 = vmatpush1.xpose.msra.mxu0 0.0
    %1134 = vmatprep.subr.mxu0 0.0
    %1135 = vmatpush1.xpose.msra.mxu0 0.0
    %1136 = vmatprep.subr.mxu0 0.0
    %1137 = vmatpush1.xpose.msra.mxu0 0.0
    %1138 = vmatprep.subr.mxu0 0.0
    %1139 = vmatpush1.xpose.msra.mxu0 0.0
    %1140 = vmatprep.subr.mxu0 0.0
    %1141 = vmatpush1.xpose.msra.mxu0 0.0
    %1142 = vmatprep.subr.mxu0 0.0
    %1143 = vmatpush1.xpose.msra.mxu0 0.0
    %1144 = vmatprep.subr.mxu0 0.0
    %1145 = vmatpush1.xpose.msra.mxu0 0.0
    %1146 = vmatprep.subr.mxu0 0.0
    %1147 = vmatpush1.xpose.msra.mxu0 0.0
    %1148 = vmatprep.mubr.f32.mxu0 %v44
    %1149 = vmatmul.mubr.f32.gmra.mrb[0].mxu0 %v43
    %v1150 = vpop.f32.mrb[0].mxu0
    %v1151 = vadd.f32 %v350, %v1150
    %v1152 = vpop.f32.mrb[0].mxu0
    %1153 = vmatprep.mubr.f32.mxu0 %v47
    %1154 = vmatmul.mubr.f32.gmra.mrb[0].mxu0 %v46
    %v1155 = vpop.f32.mrb[0].mxu0
    %v1156 = vadd.f32 %v350, %v1155
    %v1157 = vpop.f32.mrb[0].mxu0
    %1158 = vmatprep.mubr.f32.mxu0 %v50
    %1159 = vmatmul.mubr.f32.gmra.mrb[0].mxu0 %v49
    %v1160 = vpop.f32.mrb[0].mxu0
    %v1161 = vadd.f32 %v350, %v1160
    %v1162 = vpop.f32.mrb[0].mxu0
    %1163 = vmatprep.mubr.f32.mxu0 %v53
    %1164 = vmatmul.mubr.f32.gmra.mrb[0].mxu0 %v52
    %v1165 = vpop.f32.mrb[0].mxu0
    %v1166 = vadd.f32 %v350, %v1165
    %v1167 = vpop.f32.mrb[0].mxu0
    %1168 = vmatprep.mubr.f32.mxu0 %v56
    %1169 = vmatmul.mubr.f32.gmra.mrb[0].mxu0 %v55
    %v1170 = vpop.f32.mrb[0].mxu0
    %v1171 = vadd.f32 %v350, %v1170
    %v1172 = vpop.f32.mrb[0].mxu0
    %1173 = vmatprep.mubr.f32.mxu0 %v59
    %1174 = vmatmul.mubr.f32.gmra.mrb[0].mxu0 %v58
    %v1175 = vpop.f32.mrb[0].mxu0
    %v1176 = vadd.f32 %v350, %v1175
    %v1177 = vpop.f32.mrb[0].mxu0
    %1178 = vmatprep.mubr.f32.mxu0 %v62
    %1179 = vmatmul.mubr.f32.gmra.mrb[0].mxu0 %v61
    %v1180 = vpop.f32.mrb[0].mxu0
    %v1181 = vadd.f32 %v350, %v1180
    %v1182 = vpop.f32.mrb[0].mxu0
    %1183 = vmatprep.mubr.f32.mxu0 %v65
    %1184 = vmatmul.mubr.f32.gmra.mrb[0].mxu0 %v64
    %v1185 = vpop.f32.mrb[0].mxu0
    %v1186 = vadd.f32 %v350, %v1185
    %v1187 = vpop.f32.mrb[0].mxu0
    %1188 = vmatprep.mubr.f32.mxu0 %v68
    %1189 = vmatmul.mubr.f32.gmra.mrb[0].mxu0 %v67
    %v1190 = vpop.f32.mrb[0].mxu0
    %v1191 = vadd.f32 %v350, %v1190
    %v1192 = vpop.f32.mrb[0].mxu0
    %1193 = vmatprep.mubr.f32.mxu0 %v71
    %1194 = vmatmul.mubr.f32.gmra.mrb[0].mxu0 %v70
    %v1195 = vpop.f32.mrb[0].mxu0
    %v1196 = vadd.f32 %v350, %v1195
    %v1197 = vpop.f32.mrb[0].mxu0
    %1198 = vmatprep.mubr.f32.mxu0 %v74
    %1199 = vmatmul.mubr.f32.gmra.mrb[0].mxu0 %v73
    %v1200 = vpop.f32.mrb[0].mxu0
    %v1201 = vadd.f32 %v350, %v1200
    %v1202 = vpop.f32.mrb[0].mxu0
    %1203 = vmatprep.mubr.f32.mxu0 %v77
    %1204 = vmatmul.mubr.f32.gmra.mrb[0].mxu0 %v76
    %v1205 = vpop.f32.mrb[0].mxu0
    %v1206 = vadd.f32 %v350, %v1205
    %v1207 = vpop.f32.mrb[0].mxu0
    %1208 = vmatprep.mubr.f32.mxu0 %v80
    %1209 = vmatmul.mubr.f32.gmra.mrb[0].mxu0 %v79
    %v1210 = vpop.f32.mrb[0].mxu0
    %v1211 = vadd.f32 %v350, %v1210
    %v1212 = vpop.f32.mrb[0].mxu0
    %1213 = vmatprep.mubr.f32.mxu0 %v83
    %1214 = vmatmul.mubr.f32.gmra.mrb[0].mxu0 %v82
    %v1215 = vpop.f32.mrb[0].mxu0
    %v1216 = vadd.f32 %v350, %v1215
    %v1217 = vpop.f32.mrb[0].mxu0
    %1218 = vmatprep.mubr.f32.mxu0 %v86
    %1219 = vmatmul.mubr.f32.gmra.mrb[0].mxu0 %v85
    %v1220 = vpop.f32.mrb[0].mxu0
    %v1221 = vadd.f32 %v350, %v1220
    %v1222 = vpop.f32.mrb[0].mxu0
    %1223 = vmatprep.mubr.f32.mxu0 %v89
    %1224 = vmatmul.mubr.f32.gmra.mrb[0].mxu0 %v88
    %v1225 = vpop.f32.mrb[0].mxu0
    %v1226 = vadd.f32 %v350, %v1225
    %v1227 = vpop.f32.mrb[0].mxu0
    %1228 = vmatprep.mubr.f32.mxu0 %v92
    %1229 = vmatmul.mubr.f32.gmra.mrb[0].mxu0 %v91
    %v1230 = vpop.f32.mrb[0].mxu0
    %v1231 = vadd.f32 %v350, %v1230
    %v1232 = vpop.f32.mrb[0].mxu0
    %1233 = vmatprep.mubr.f32.mxu0 %v95
    %1234 = vmatmul.mubr.f32.gmra.mrb[0].mxu0 %v94
    %v1235 = vpop.f32.mrb[0].mxu0
    %v1236 = vadd.f32 %v350, %v1235
    %v1237 = vpop.f32.mrb[0].mxu0
    %1238 = vmatprep.mubr.f32.mxu0 %v98
    %1239 = vmatmul.mubr.f32.gmra.mrb[0].mxu0 %v97
    %v1240 = vpop.f32.mrb[0].mxu0
    %v1241 = vadd.f32 %v350, %v1240
    %v1242 = vpop.f32.mrb[0].mxu0
    %1243 = vmatprep.mubr.f32.mxu0 %v101
    %1244 = vmatmul.mubr.f32.gmra.mrb[0].mxu0 %v100
    %v1245 = vpop.f32.mrb[0].mxu0
    %v1246 = vadd.f32 %v350, %v1245
    %v1247 = vpop.f32.mrb[0].mxu0
    %1248 = vmatprep.mubr.f32.mxu0 %v104
    %1249 = vmatmul.mubr.f32.gmra.mrb[0].mxu0 %v103
    %v1250 = vpop.f32.mrb[0].mxu0
    %v1251 = vadd.f32 %v350, %v1250
    %v1252 = vpop.f32.mrb[0].mxu0
    %1253 = vmatprep.mubr.f32.mxu0 %v107
    %1254 = vmatmul.mubr.f32.gmra.mrb[0].mxu0 %v106
    %v1255 = vpop.f32.mrb[0].mxu0
    %v1256 = vadd.f32 %v350, %v1255
    %v1257 = vpop.f32.mrb[0].mxu0
    %1258 = vmatprep.mubr.f32.mxu0 %v110
    %1259 = vmatmul.mubr.f32.gmra.mrb[0].mxu0 %v109
    %v1260 = vpop.f32.mrb[0].mxu0
    %v1261 = vadd.f32 %v350, %v1260
    %v1262 = vpop.f32.mrb[0].mxu0
    %1263 = vmatprep.mubr.f32.mxu0 %v113
    %1264 = vmatmul.mubr.f32.gmra.mrb[0].mxu0 %v112
    %v1265 = vpop.f32.mrb[0].mxu0
    %v1266 = vadd.f32 %v350, %v1265
    %v1267 = vpop.f32.mrb[0].mxu0
    %1268 = vmatprep.mubr.f32.mxu0 %v116
    %1269 = vmatmul.mubr.f32.gmra.mrb[0].mxu0 %v115
    %v1270 = vpop.f32.mrb[0].mxu0
    %v1271 = vadd.f32 %v350, %v1270
    %v1272 = vpop.f32.mrb[0].mxu0
    %1273 = vmatprep.mubr.f32.mxu0 %v119
    %1274 = vmatmul.mubr.f32.gmra.mrb[0].mxu0 %v118
    %v1275 = vpop.f32.mrb[0].mxu0
    %v1276 = vadd.f32 %v350, %v1275
    %v1277 = vpop.f32.mrb[0].mxu0
    %1278 = vmatprep.mubr.f32.mxu0 %v122
    %1279 = vmatmul.mubr.f32.gmra.mrb[0].mxu0 %v121
    %v1280 = vpop.f32.mrb[0].mxu0
    %v1281 = vadd.f32 %v350, %v1280
    %v1282 = vpop.f32.mrb[0].mxu0
    %1283 = vmatprep.mubr.f32.mxu0 %v125
    %1284 = vmatmul.mubr.f32.gmra.mrb[0].mxu0 %v124
    %v1285 = vpop.f32.mrb[0].mxu0
    %v1286 = vadd.f32 %v350, %v1285
    %v1287 = vpop.f32.mrb[0].mxu0
    %1288 = vmatprep.mubr.f32.mxu0 %v128
    %1289 = vmatmul.mubr.f32.gmra.mrb[0].mxu0 %v127
    %v1290 = vpop.f32.mrb[0].mxu0
    %v1291 = vadd.f32 %v350, %v1290
    %v1292 = vpop.f32.mrb[0].mxu0
    %1293 = vmatprep.mubr.f32.mxu0 %v131
    %1294 = vmatmul.mubr.f32.gmra.mrb[0].mxu0 %v130
    %v1295 = vpop.f32.mrb[0].mxu0
    %v1296 = vadd.f32 %v350, %v1295
    %v1297 = vpop.f32.mrb[0].mxu0
    %1298 = vmatprep.mubr.f32.mxu0 %v134
    %1299 = vmatmul.mubr.f32.gmra.mrb[0].mxu0 %v133
    %v1300 = vpop.f32.mrb[0].mxu0
    %v1301 = vadd.f32 %v350, %v1300
    %v1302 = vpop.f32.mrb[0].mxu0
    %1303 = vmatprep.mubr.f32.mxu0 %v137
    %1304 = vmatmul.mubr.f32.gmra.mrb[0].mxu0 %v136
    %v1305 = vpop.f32.mrb[0].mxu0
    %v1306 = vadd.f32 %v350, %v1305
    %v1307 = vpop.f32.mrb[0].mxu0
    %1308 = vmatprep.mubr.f32.mxu0 %v140
    %1309 = vmatmul.mubr.f32.gmra.mrb[0].mxu0 %v139
    %v1310 = vpop.f32.mrb[0].mxu0
    %v1311 = vadd.f32 %v350, %v1310
    %v1312 = vpop.f32.mrb[0].mxu0
    %1313 = vmatprep.mubr.f32.mxu0 %v143
    %1314 = vmatmul.mubr.f32.gmra.mrb[0].mxu0 %v142
    %v1315 = vpop.f32.mrb[0].mxu0
    %v1316 = vadd.f32 %v350, %v1315
    %v1317 = vpop.f32.mrb[0].mxu0
    %1318 = vmatprep.mubr.f32.mxu0 %v146
    %1319 = vmatmul.mubr.f32.gmra.mrb[0].mxu0 %v145
    %v1320 = vpop.f32.mrb[0].mxu0
    %v1321 = vadd.f32 %v350, %v1320
    %v1322 = vpop.f32.mrb[0].mxu0
    %1323 = vmatprep.mubr.f32.mxu0 %v149
    %1324 = vmatmul.mubr.f32.gmra.mrb[0].mxu0 %v148
    %v1325 = vpop.f32.mrb[0].mxu0
    %v1326 = vadd.f32 %v350, %v1325
    %v1327 = vpop.f32.mrb[0].mxu0
    %1328 = vmatprep.mubr.f32.mxu0 %v152
    %1329 = vmatmul.mubr.f32.gmra.mrb[0].mxu0 %v151
    %v1330 = vpop.f32.mrb[0].mxu0
    %v1331 = vadd.f32 %v350, %v1330
    %v1332 = vpop.f32.mrb[0].mxu0
    %1333 = vmatprep.mubr.f32.mxu0 %v155
    %1334 = vmatmul.mubr.f32.gmra.mrb[0].mxu0 %v154
    %v1335 = vpop.f32.mrb[0].mxu0
    %v1336 = vadd.f32 %v350, %v1335
    %v1337 = vpop.f32.mrb[0].mxu0
    %1338 = vmatprep.mubr.f32.mxu0 %v158
    %1339 = vmatmul.mubr.f32.gmra.mrb[0].mxu0 %v157
    %v1340 = vpop.f32.mrb[0].mxu0
    %v1341 = vadd.f32 %v350, %v1340
    %v1342 = vpop.f32.mrb[0].mxu0
    %1343 = vmatprep.mubr.f32.mxu0 %v161
    %1344 = vmatmul.mubr.f32.gmra.mrb[0].mxu0 %v160
    %v1345 = vpop.f32.mrb[0].mxu0
    %v1346 = vadd.f32 %v350, %v1345
    %v1347 = vpop.f32.mrb[0].mxu0
    %1348 = vmatprep.mubr.f32.mxu0 %v164
    %1349 = vmatmul.mubr.f32.gmra.mrb[0].mxu0 %v163
    %v1350 = vpop.f32.mrb[0].mxu0
    %v1351 = vadd.f32 %v350, %v1350
    %v1352 = vpop.f32.mrb[0].mxu0
    %1353 = vmatprep.mubr.f32.mxu0 %v167
    %1354 = vmatmul.mubr.f32.gmra.mrb[0].mxu0 %v166
    %v1355 = vpop.f32.mrb[0].mxu0
    %v1356 = vadd.f32 %v350, %v1355
    %v1357 = vpop.f32.mrb[0].mxu0
    %1358 = vmatprep.mubr.f32.mxu0 %v170
    %1359 = vmatmul.mubr.f32.gmra.mrb[0].mxu0 %v169
    %v1360 = vpop.f32.mrb[0].mxu0
    %v1361 = vadd.f32 %v350, %v1360
    %v1362 = vpop.f32.mrb[0].mxu0
    %1363 = vmatprep.mubr.f32.mxu0 %v173
    %1364 = vmatmul.mubr.f32.gmra.mrb[0].mxu0 %v172
    %v1365 = vpop.f32.mrb[0].mxu0
    %v1366 = vadd.f32 %v350, %v1365
    %v1367 = vpop.f32.mrb[0].mxu0
    %1368 = vmatprep.mubr.f32.mxu0 %v176
    %1369 = vmatmul.mubr.f32.gmra.mrb[0].mxu0 %v175
    %v1370 = vpop.f32.mrb[0].mxu0
    %v1371 = vadd.f32 %v350, %v1370
    %v1372 = vpop.f32.mrb[0].mxu0
    %1373 = vmatprep.mubr.f32.mxu0 %v179
    %1374 = vmatmul.mubr.f32.gmra.mrb[0].mxu0 %v178
    %v1375 = vpop.f32.mrb[0].mxu0
    %v1376 = vadd.f32 %v350, %v1375
    %v1377 = vpop.f32.mrb[0].mxu0
    %1378 = vmatprep.mubr.f32.mxu0 %v182
    %1379 = vmatmul.mubr.f32.gmra.mrb[0].mxu0 %v181
    %v1380 = vpop.f32.mrb[0].mxu0
    %v1381 = vadd.f32 %v350, %v1380
    %v1382 = vpop.f32.mrb[0].mxu0
    %1383 = vmatprep.mubr.f32.mxu0 %v185
    %1384 = vmatmul.mubr.f32.gmra.mrb[0].mxu0 %v184
    %v1385 = vpop.f32.mrb[0].mxu0
    %v1386 = vadd.f32 %v350, %v1385
    %v1387 = vpop.f32.mrb[0].mxu0
    %1388 = vmatprep.mubr.f32.mxu0 %v188
    %1389 = vmatmul.mubr.f32.gmra.mrb[0].mxu0 %v187
    %v1390 = vpop.f32.mrb[0].mxu0
    %v1391 = vadd.f32 %v350, %v1390
    %v1392 = vpop.f32.mrb[0].mxu0
    %1393 = vmatprep.mubr.f32.mxu0 %v191
    %1394 = vmatmul.mubr.f32.gmra.mrb[0].mxu0 %v190
    %v1395 = vpop.f32.mrb[0].mxu0
    %v1396 = vadd.f32 %v350, %v1395
    %v1397 = vpop.f32.mrb[0].mxu0
    %1398 = vdwg.mxu0
    %1399 = vmatprep.subr.mxu0 0.0
    %1400 = vmatpush1.xpose.msra.mxu0 %v291
    %1401 = vmatprep.subr.mxu0 0.0
    %1402 = vmatpush1.xpose.msra.mxu0 %v294
    %1403 = vmatprep.subr.mxu0 0.0
    %1404 = vmatpush1.xpose.msra.mxu0 %v297
    %1405 = vmatprep.subr.mxu0 0.0
    %1406 = vmatpush1.xpose.msra.mxu0 %v300
    %1407 = vmatprep.subr.mxu0 0.0
    %1408 = vmatpush1.xpose.msra.mxu0 %v303
    %1409 = vmatprep.subr.mxu0 0.0
    %1410 = vmatpush1.xpose.msra.mxu0 %v306
    %1411 = vmatprep.subr.mxu0 0.0
    %1412 = vmatpush1.xpose.msra.mxu0 %v309
    %1413 = vmatprep.subr.mxu0 0.0
    %1414 = vmatpush1.xpose.msra.mxu0 %v312
    %1415 = vmatprep.subr.mxu0 0.0
    %1416 = vmatpush1.xpose.msra.mxu0 %v315
    %1417 = vmatprep.subr.mxu0 0.0
    %1418 = vmatpush1.xpose.msra.mxu0 %v318
    %1419 = vmatprep.subr.mxu0 0.0
    %1420 = vmatpush1.xpose.msra.mxu0 %v321
    %1421 = vmatprep.subr.mxu0 0.0
    %1422 = vmatpush1.xpose.msra.mxu0 %v324
    %1423 = vmatprep.subr.mxu0 0.0
    %1424 = vmatpush1.xpose.msra.mxu0 %v327
    %1425 = vmatprep.subr.mxu0 0.0
    %1426 = vmatpush1.xpose.msra.mxu0 %v330
    %1427 = vmatprep.subr.mxu0 0.0
    %1428 = vmatpush1.xpose.msra.mxu0 %v333
    %1429 = vmatprep.subr.mxu0 0.0
    %1430 = vmatpush1.xpose.msra.mxu0 %v336
    %1431 = vmatprep.subr.mxu0 0.0
    %1432 = vmatpush1.xpose.msra.mxu0 0.0
    %1433 = vmatprep.subr.mxu0 0.0
    %1434 = vmatpush1.xpose.msra.mxu0 0.0
    %1435 = vmatprep.subr.mxu0 0.0
    %1436 = vmatpush1.xpose.msra.mxu0 0.0
    %1437 = vmatprep.subr.mxu0 0.0
    %1438 = vmatpush1.xpose.msra.mxu0 0.0
    %1439 = vmatprep.subr.mxu0 0.0
    %1440 = vmatpush1.xpose.msra.mxu0 0.0
    %1441 = vmatprep.subr.mxu0 0.0
    %1442 = vmatpush1.xpose.msra.mxu0 0.0
    %1443 = vmatprep.subr.mxu0 0.0
    %1444 = vmatpush1.xpose.msra.mxu0 0.0
    %1445 = vmatprep.subr.mxu0 0.0
    %1446 = vmatpush1.xpose.msra.mxu0 0.0
    %1447 = vmatprep.subr.mxu0 0.0
    %1448 = vmatpush1.xpose.msra.mxu0 0.0
    %1449 = vmatprep.subr.mxu0 0.0
    %1450 = vmatpush1.xpose.msra.mxu0 0.0
    %1451 = vmatprep.subr.mxu0 0.0
    %1452 = vmatpush1.xpose.msra.mxu0 0.0
    %1453 = vmatprep.subr.mxu0 0.0
    %1454 = vmatpush1.xpose.msra.mxu0 0.0
    %1455 = vmatprep.subr.mxu0 0.0
    %1456 = vmatpush1.xpose.msra.mxu0 0.0
    %1457 = vmatprep.subr.mxu0 0.0
    %1458 = vmatpush1.xpose.msra.mxu0 0.0
    %1459 = vmatprep.subr.mxu0 0.0
    %1460 = vmatpush1.xpose.msra.mxu0 0.0
    %1461 = vmatprep.subr.mxu0 0.0
    %1462 = vmatpush1.xpose.msra.mxu0 0.0
    %1463 = vmatprep.mubr.f32.mxu0 0.0
    %1464 = vmatmul.mubr.f32.gmra.mrb[0].mxu0 %v45
    %v1465 = vpop.f32.mrb[0].mxu0
    %v1466 = vadd.f32 %v1151, %v1465
    %v1467 = vpop.f32.mrb[0].mxu0
    %1468 = vmatprep.mubr.f32.mxu0 0.0
    %1469 = vmatmul.mubr.f32.gmra.mrb[0].mxu0 %v48
    %v1470 = vpop.f32.mrb[0].mxu0
    %v1471 = vadd.f32 %v1156, %v1470
    %v1472 = vpop.f32.mrb[0].mxu0
    %1473 = vmatprep.mubr.f32.mxu0 0.0
    %1474 = vmatmul.mubr.f32.gmra.mrb[0].mxu0 %v51
    %v1475 = vpop.f32.mrb[0].mxu0
    %v1476 = vadd.f32 %v1161, %v1475
    %v1477 = vpop.f32.mrb[0].mxu0
    %1478 = vmatprep.mubr.f32.mxu0 0.0
    %1479 = vmatmul.mubr.f32.gmra.mrb[0].mxu0 %v54
    %v1480 = vpop.f32.mrb[0].mxu0
    %v1481 = vadd.f32 %v1166, %v1480
    %v1482 = vpop.f32.mrb[0].mxu0
    %1483 = vmatprep.mubr.f32.mxu0 0.0
    %1484 = vmatmul.mubr.f32.gmra.mrb[0].mxu0 %v57
    %v1485 = vpop.f32.mrb[0].mxu0
    %v1486 = vadd.f32 %v1171, %v1485
    %v1487 = vpop.f32.mrb[0].mxu0
    %1488 = vmatprep.mubr.f32.mxu0 0.0
    %1489 = vmatmul.mubr.f32.gmra.mrb[0].mxu0 %v60
    %v1490 = vpop.f32.mrb[0].mxu0
    %v1491 = vadd.f32 %v1176, %v1490
    %v1492 = vpop.f32.mrb[0].mxu0
    %1493 = vmatprep.mubr.f32.mxu0 0.0
    %1494 = vmatmul.mubr.f32.gmra.mrb[0].mxu0 %v63
    %v1495 = vpop.f32.mrb[0].mxu0
    %v1496 = vadd.f32 %v1181, %v1495
    %v1497 = vpop.f32.mrb[0].mxu0
    %1498 = vmatprep.mubr.f32.mxu0 0.0
    %1499 = vmatmul.mubr.f32.gmra.mrb[0].mxu0 %v66
    %v1500 = vpop.f32.mrb[0].mxu0
    %v1501 = vadd.f32 %v1186, %v1500
    %v1502 = vpop.f32.mrb[0].mxu0
    %1503 = vmatprep.mubr.f32.mxu0 0.0
    %1504 = vmatmul.mubr.f32.gmra.mrb[0].mxu0 %v69
    %v1505 = vpop.f32.mrb[0].mxu0
    %v1506 = vadd.f32 %v1191, %v1505
    %v1507 = vpop.f32.mrb[0].mxu0
    %1508 = vmatprep.mubr.f32.mxu0 0.0
    %1509 = vmatmul.mubr.f32.gmra.mrb[0].mxu0 %v72
    %v1510 = vpop.f32.mrb[0].mxu0
    %v1511 = vadd.f32 %v1196, %v1510
    %v1512 = vpop.f32.mrb[0].mxu0
    %1513 = vmatprep.mubr.f32.mxu0 0.0
    %1514 = vmatmul.mubr.f32.gmra.mrb[0].mxu0 %v75
    %v1515 = vpop.f32.mrb[0].mxu0
    %v1516 = vadd.f32 %v1201, %v1515
    %v1517 = vpop.f32.mrb[0].mxu0
    %1518 = vmatprep.mubr.f32.mxu0 0.0
    %1519 = vmatmul.mubr.f32.gmra.mrb[0].mxu0 %v78
    %v1520 = vpop.f32.mrb[0].mxu0
    %v1521 = vadd.f32 %v1206, %v1520
    %v1522 = vpop.f32.mrb[0].mxu0
    %1523 = vmatprep.mubr.f32.mxu0 0.0
    %1524 = vmatmul.mubr.f32.gmra.mrb[0].mxu0 %v81
    %v1525 = vpop.f32.mrb[0].mxu0
    %v1526 = vadd.f32 %v1211, %v1525
    %v1527 = vpop.f32.mrb[0].mxu0
    %1528 = vmatprep.mubr.f32.mxu0 0.0
    %1529 = vmatmul.mubr.f32.gmra.mrb[0].mxu0 %v84
    %v1530 = vpop.f32.mrb[0].mxu0
    %v1531 = vadd.f32 %v1216, %v1530
    %v1532 = vpop.f32.mrb[0].mxu0
    %1533 = vmatprep.mubr.f32.mxu0 0.0
    %1534 = vmatmul.mubr.f32.gmra.mrb[0].mxu0 %v87
    %v1535 = vpop.f32.mrb[0].mxu0
    %v1536 = vadd.f32 %v1221, %v1535
    %v1537 = vpop.f32.mrb[0].mxu0
    %1538 = vmatprep.mubr.f32.mxu0 0.0
    %1539 = vmatmul.mubr.f32.gmra.mrb[0].mxu0 %v90
    %v1540 = vpop.f32.mrb[0].mxu0
    %v1541 = vadd.f32 %v1226, %v1540
    %v1542 = vpop.f32.mrb[0].mxu0
    %1543 = vmatprep.mubr.f32.mxu0 0.0
    %1544 = vmatmul.mubr.f32.gmra.mrb[0].mxu0 %v93
    %v1545 = vpop.f32.mrb[0].mxu0
    %v1546 = vadd.f32 %v1231, %v1545
    %v1547 = vpop.f32.mrb[0].mxu0
    %1548 = vmatprep.mubr.f32.mxu0 0.0
    %1549 = vmatmul.mubr.f32.gmra.mrb[0].mxu0 %v96
    %v1550 = vpop.f32.mrb[0].mxu0
    %v1551 = vadd.f32 %v1236, %v1550
    %v1552 = vpop.f32.mrb[0].mxu0
    %1553 = vmatprep.mubr.f32.mxu0 0.0
    %1554 = vmatmul.mubr.f32.gmra.mrb[0].mxu0 %v99
    %v1555 = vpop.f32.mrb[0].mxu0
    %v1556 = vadd.f32 %v1241, %v1555
    %v1557 = vpop.f32.mrb[0].mxu0
    %1558 = vmatprep.mubr.f32.mxu0 0.0
    %1559 = vmatmul.mubr.f32.gmra.mrb[0].mxu0 %v102
    %v1560 = vpop.f32.mrb[0].mxu0
    %v1561 = vadd.f32 %v1246, %v1560
    %v1562 = vpop.f32.mrb[0].mxu0
    %1563 = vmatprep.mubr.f32.mxu0 0.0
    %1564 = vmatmul.mubr.f32.gmra.mrb[0].mxu0 %v105
    %v1565 = vpop.f32.mrb[0].mxu0
    %v1566 = vadd.f32 %v1251, %v1565
    %v1567 = vpop.f32.mrb[0].mxu0
    %1568 = vmatprep.mubr.f32.mxu0 0.0
    %1569 = vmatmul.mubr.f32.gmra.mrb[0].mxu0 %v108
    %v1570 = vpop.f32.mrb[0].mxu0
    %v1571 = vadd.f32 %v1256, %v1570
    %v1572 = vpop.f32.mrb[0].mxu0
    %1573 = vmatprep.mubr.f32.mxu0 0.0
    %1574 = vmatmul.mubr.f32.gmra.mrb[0].mxu0 %v111
    %v1575 = vpop.f32.mrb[0].mxu0
    %v1576 = vadd.f32 %v1261, %v1575
    %v1577 = vpop.f32.mrb[0].mxu0
    %1578 = vmatprep.mubr.f32.mxu0 0.0
    %1579 = vmatmul.mubr.f32.gmra.mrb[0].mxu0 %v114
    %v1580 = vpop.f32.mrb[0].mxu0
    %v1581 = vadd.f32 %v1266, %v1580
    %v1582 = vpop.f32.mrb[0].mxu0
    %1583 = vmatprep.mubr.f32.mxu0 0.0
    %1584 = vmatmul.mubr.f32.gmra.mrb[0].mxu0 %v117
    %v1585 = vpop.f32.mrb[0].mxu0
    %v1586 = vadd.f32 %v1271, %v1585
    %v1587 = vpop.f32.mrb[0].mxu0
    %1588 = vmatprep.mubr.f32.mxu0 0.0
    %1589 = vmatmul.mubr.f32.gmra.mrb[0].mxu0 %v120
    %v1590 = vpop.f32.mrb[0].mxu0
    %v1591 = vadd.f32 %v1276, %v1590
    %v1592 = vpop.f32.mrb[0].mxu0
    %1593 = vmatprep.mubr.f32.mxu0 0.0
    %1594 = vmatmul.mubr.f32.gmra.mrb[0].mxu0 %v123
    %v1595 = vpop.f32.mrb[0].mxu0
    %v1596 = vadd.f32 %v1281, %v1595
    %v1597 = vpop.f32.mrb[0].mxu0
    %1598 = vmatprep.mubr.f32.mxu0 0.0
    %1599 = vmatmul.mubr.f32.gmra.mrb[0].mxu0 %v126
    %v1600 = vpop.f32.mrb[0].mxu0
    %v1601 = vadd.f32 %v1286, %v1600
    %v1602 = vpop.f32.mrb[0].mxu0
    %1603 = vmatprep.mubr.f32.mxu0 0.0
    %1604 = vmatmul.mubr.f32.gmra.mrb[0].mxu0 %v129
    %v1605 = vpop.f32.mrb[0].mxu0
    %v1606 = vadd.f32 %v1291, %v1605
    %v1607 = vpop.f32.mrb[0].mxu0
    %1608 = vmatprep.mubr.f32.mxu0 0.0
    %1609 = vmatmul.mubr.f32.gmra.mrb[0].mxu0 %v132
    %v1610 = vpop.f32.mrb[0].mxu0
    %v1611 = vadd.f32 %v1296, %v1610
    %v1612 = vpop.f32.mrb[0].mxu0
    %1613 = vmatprep.mubr.f32.mxu0 0.0
    %1614 = vmatmul.mubr.f32.gmra.mrb[0].mxu0 %v135
    %v1615 = vpop.f32.mrb[0].mxu0
    %v1616 = vadd.f32 %v1301, %v1615
    %v1617 = vpop.f32.mrb[0].mxu0
    %1618 = vmatprep.mubr.f32.mxu0 0.0
    %1619 = vmatmul.mubr.f32.gmra.mrb[0].mxu0 %v138
    %v1620 = vpop.f32.mrb[0].mxu0
    %v1621 = vadd.f32 %v1306, %v1620
    %v1622 = vpop.f32.mrb[0].mxu0
    %1623 = vmatprep.mubr.f32.mxu0 0.0
    %1624 = vmatmul.mubr.f32.gmra.mrb[0].mxu0 %v141
    %v1625 = vpop.f32.mrb[0].mxu0
    %v1626 = vadd.f32 %v1311, %v1625
    %v1627 = vpop.f32.mrb[0].mxu0
    %1628 = vmatprep.mubr.f32.mxu0 0.0
    %1629 = vmatmul.mubr.f32.gmra.mrb[0].mxu0 %v144
    %v1630 = vpop.f32.mrb[0].mxu0
    %v1631 = vadd.f32 %v1316, %v1630
    %v1632 = vpop.f32.mrb[0].mxu0
    %1633 = vmatprep.mubr.f32.mxu0 0.0
    %1634 = vmatmul.mubr.f32.gmra.mrb[0].mxu0 %v147
    %v1635 = vpop.f32.mrb[0].mxu0
    %v1636 = vadd.f32 %v1321, %v1635
    %v1637 = vpop.f32.mrb[0].mxu0
    %1638 = vmatprep.mubr.f32.mxu0 0.0
    %1639 = vmatmul.mubr.f32.gmra.mrb[0].mxu0 %v150
    %v1640 = vpop.f32.mrb[0].mxu0
    %v1641 = vadd.f32 %v1326, %v1640
    %v1642 = vpop.f32.mrb[0].mxu0
    %1643 = vmatprep.mubr.f32.mxu0 0.0
    %1644 = vmatmul.mubr.f32.gmra.mrb[0].mxu0 %v153
    %v1645 = vpop.f32.mrb[0].mxu0
    %v1646 = vadd.f32 %v1331, %v1645
    %v1647 = vpop.f32.mrb[0].mxu0
    %1648 = vmatprep.mubr.f32.mxu0 0.0
    %1649 = vmatmul.mubr.f32.gmra.mrb[0].mxu0 %v156
    %v1650 = vpop.f32.mrb[0].mxu0
    %v1651 = vadd.f32 %v1336, %v1650
    %v1652 = vpop.f32.mrb[0].mxu0
    %1653 = vmatprep.mubr.f32.mxu0 0.0
    %1654 = vmatmul.mubr.f32.gmra.mrb[0].mxu0 %v159
    %v1655 = vpop.f32.mrb[0].mxu0
    %v1656 = vadd.f32 %v1341, %v1655
    %v1657 = vpop.f32.mrb[0].mxu0
    %1658 = vmatprep.mubr.f32.mxu0 0.0
    %1659 = vmatmul.mubr.f32.gmra.mrb[0].mxu0 %v162
    %v1660 = vpop.f32.mrb[0].mxu0
    %v1661 = vadd.f32 %v1346, %v1660
    %v1662 = vpop.f32.mrb[0].mxu0
    %1663 = vmatprep.mubr.f32.mxu0 0.0
    %1664 = vmatmul.mubr.f32.gmra.mrb[0].mxu0 %v165
    %v1665 = vpop.f32.mrb[0].mxu0
    %v1666 = vadd.f32 %v1351, %v1665
    %v1667 = vpop.f32.mrb[0].mxu0
    %1668 = vmatprep.mubr.f32.mxu0 0.0
    %1669 = vmatmul.mubr.f32.gmra.mrb[0].mxu0 %v168
    %v1670 = vpop.f32.mrb[0].mxu0
    %v1671 = vadd.f32 %v1356, %v1670
    %v1672 = vpop.f32.mrb[0].mxu0
    %1673 = vmatprep.mubr.f32.mxu0 0.0
    %1674 = vmatmul.mubr.f32.gmra.mrb[0].mxu0 %v171
    %v1675 = vpop.f32.mrb[0].mxu0
    %v1676 = vadd.f32 %v1361, %v1675
    %v1677 = vpop.f32.mrb[0].mxu0
    %1678 = vmatprep.mubr.f32.mxu0 0.0
    %1679 = vmatmul.mubr.f32.gmra.mrb[0].mxu0 %v174
    %v1680 = vpop.f32.mrb[0].mxu0
    %v1681 = vadd.f32 %v1366, %v1680
    %v1682 = vpop.f32.mrb[0].mxu0
    %1683 = vmatprep.mubr.f32.mxu0 0.0
    %1684 = vmatmul.mubr.f32.gmra.mrb[0].mxu0 %v177
    %v1685 = vpop.f32.mrb[0].mxu0
    %v1686 = vadd.f32 %v1371, %v1685
    %v1687 = vpop.f32.mrb[0].mxu0
    %1688 = vmatprep.mubr.f32.mxu0 0.0
    %1689 = vmatmul.mubr.f32.gmra.mrb[0].mxu0 %v180
    %v1690 = vpop.f32.mrb[0].mxu0
    %v1691 = vadd.f32 %v1376, %v1690
    %v1692 = vpop.f32.mrb[0].mxu0
    %1693 = vmatprep.mubr.f32.mxu0 0.0
    %1694 = vmatmul.mubr.f32.gmra.mrb[0].mxu0 %v183
    %v1695 = vpop.f32.mrb[0].mxu0
    %v1696 = vadd.f32 %v1381, %v1695
    %v1697 = vpop.f32.mrb[0].mxu0
    %1698 = vmatprep.mubr.f32.mxu0 0.0
    %1699 = vmatmul.mubr.f32.gmra.mrb[0].mxu0 %v186
    %v1700 = vpop.f32.mrb[0].mxu0
    %v1701 = vadd.f32 %v1386, %v1700
    %v1702 = vpop.f32.mrb[0].mxu0
    %1703 = vmatprep.mubr.f32.mxu0 0.0
    %1704 = vmatmul.mubr.f32.gmra.mrb[0].mxu0 %v189
    %v1705 = vpop.f32.mrb[0].mxu0
    %v1706 = vadd.f32 %v1391, %v1705
    %v1707 = vpop.f32.mrb[0].mxu0
    %1708 = vmatprep.mubr.f32.mxu0 0.0
    %1709 = vmatmul.mubr.f32.gmra.mrb[0].mxu0 %v192
    %v1710 = vpop.f32.mrb[0].mxu0
    %v1711 = vadd.f32 %v1396, %v1710
    %v1712 = vpop.f32.mrb[0].mxu0
    %1713 = vdwg.mxu0
    %1714 = vst [vmem:[#allocation7] sm:$0xff] %v786
    %1715 = vst [vmem:[#allocation7 + $0x8] sm:$0xff] %v788
    %1716 = vst [vmem:[#allocation7 + $0x10] sm:$0xff] %v1466
    %1717 = vst [vmem:[#allocation7 + $0x18] sm:$0xff] %v792
    %1718 = vst [vmem:[#allocation7 + $0x20] sm:$0xff] %v794
    %1719 = vst [vmem:[#allocation7 + $0x28] sm:$0xff] %v1471
    %1720 = vst [vmem:[#allocation7 + $0x30] sm:$0xff] %v798
    %1721 = vst [vmem:[#allocation7 + $0x38] sm:$0xff] %v800
    %1722 = vst [vmem:[#allocation7 + $0x40] sm:$0xff] %v1476
    %1723 = vst [vmem:[#allocation7 + $0x48] sm:$0xff] %v804
    %1724 = vst [vmem:[#allocation7 + $0x50] sm:$0xff] %v806
    %1725 = vst [vmem:[#allocation7 + $0x58] sm:$0xff] %v1481
    %1726 = vst [vmem:[#allocation7 + $0x60] sm:$0xff] %v810
    %1727 = vst [vmem:[#allocation7 + $0x68] sm:$0xff] %v812
    %1728 = vst [vmem:[#allocation7 + $0x70] sm:$0xff] %v1486
    %1729 = vst [vmem:[#allocation7 + $0x78] sm:$0xff] %v816
    %1730 = vst [vmem:[#allocation7 + $0x80] sm:$0xff] %v818
    %1731 = vst [vmem:[#allocation7 + $0x88] sm:$0xff] %v1491
    %1732 = vst [vmem:[#allocation7 + $0x90] sm:$0xff] %v822
    %1733 = vst [vmem:[#allocation7 + $0x98] sm:$0xff] %v824
    %1734 = vst [vmem:[#allocation7 + $0xa0] sm:$0xff] %v1496
    %1735 = vst [vmem:[#allocation7 + $0xa8] sm:$0xff] %v828
    %1736 = vst [vmem:[#allocation7 + $0xb0] sm:$0xff] %v830
    %1737 = vst [vmem:[#allocation7 + $0xb8] sm:$0xff] %v1501
    %1738 = vst [vmem:[#allocation7 + $0xc0] sm:$0xff] %v834
    %1739 = vst [vmem:[#allocation7 + $0xc8] sm:$0xff] %v836
    %1740 = vst [vmem:[#allocation7 + $0xd0] sm:$0xff] %v1506
    %1741 = vst [vmem:[#allocation7 + $0xd8] sm:$0xff] %v840
    %1742 = vst [vmem:[#allocation7 + $0xe0] sm:$0xff] %v842
    %1743 = vst [vmem:[#allocation7 + $0xe8] sm:$0xff] %v1511
    %1744 = vst [vmem:[#allocation7 + $0xf0] sm:$0xff] %v846
    %1745 = vst [vmem:[#allocation7 + $0xf8] sm:$0xff] %v848
    %1746 = vst [vmem:[#allocation7 + $0x100] sm:$0xff] %v1516
    %1747 = vst [vmem:[#allocation7 + $0x108] sm:$0xff] %v852
    %1748 = vst [vmem:[#allocation7 + $0x110] sm:$0xff] %v854
    %1749 = vst [vmem:[#allocation7 + $0x118] sm:$0xff] %v1521
    %1750 = vst [vmem:[#allocation7 + $0x120] sm:$0xff] %v858
    %1751 = vst [vmem:[#allocation7 + $0x128] sm:$0xff] %v860
    %1752 = vst [vmem:[#allocation7 + $0x130] sm:$0xff] %v1526
    %1753 = vst [vmem:[#allocation7 + $0x138] sm:$0xff] %v864
    %1754 = vst [vmem:[#allocation7 + $0x140] sm:$0xff] %v866
    %1755 = vst [vmem:[#allocation7 + $0x148] sm:$0xff] %v1531
    %1756 = vst [vmem:[#allocation7 + $0x150] sm:$0xff] %v870
    %1757 = vst [vmem:[#allocation7 + $0x158] sm:$0xff] %v872
    %1758 = vst [vmem:[#allocation7 + $0x160] sm:$0xff] %v1536
    %1759 = vst [vmem:[#allocation7 + $0x168] sm:$0xff] %v876
    %1760 = vst [vmem:[#allocation7 + $0x170] sm:$0xff] %v878
    %1761 = vst [vmem:[#allocation7 + $0x178] sm:$0xff] %v1541
    %1762 = vst [vmem:[#allocation7 + $0x180] sm:$0xff] %v882
    %1763 = vst [vmem:[#allocation7 + $0x188] sm:$0xff] %v884
    %1764 = vst [vmem:[#allocation7 + $0x190] sm:$0xff] %v1546
    %1765 = vst [vmem:[#allocation7 + $0x198] sm:$0xff] %v888
    %1766 = vst [vmem:[#allocation7 + $0x1a0] sm:$0xff] %v890
    %1767 = vst [vmem:[#allocation7 + $0x1a8] sm:$0xff] %v1551
    %1768 = vst [vmem:[#allocation7 + $0x1b0] sm:$0xff] %v894
    %1769 = vst [vmem:[#allocation7 + $0x1b8] sm:$0xff] %v896
    %1770 = vst [vmem:[#allocation7 + $0x1c0] sm:$0xff] %v1556
    %1771 = vst [vmem:[#allocation7 + $0x1c8] sm:$0xff] %v900
    %1772 = vst [vmem:[#allocation7 + $0x1d0] sm:$0xff] %v902
    %1773 = vst [vmem:[#allocation7 + $0x1d8] sm:$0xff] %v1561
    %1774 = vst [vmem:[#allocation7 + $0x1e0] sm:$0xff] %v906
    %1775 = vst [vmem:[#allocation7 + $0x1e8] sm:$0xff] %v908
    %1776 = vst [vmem:[#allocation7 + $0x1f0] sm:$0xff] %v1566
    %1777 = vst [vmem:[#allocation7 + $0x1f8] sm:$0xff] %v912
    %1778 = vst [vmem:[#allocation7 + $0x200] sm:$0xff] %v914
    %1779 = vst [vmem:[#allocation7 + $0x208] sm:$0xff] %v1571
    %1780 = vst [vmem:[#allocation7 + $0x210] sm:$0xff] %v918
    %1781 = vst [vmem:[#allocation7 + $0x218] sm:$0xff] %v920
    %1782 = vst [vmem:[#allocation7 + $0x220] sm:$0xff] %v1576
    %1783 = vst [vmem:[#allocation7 + $0x228] sm:$0xff] %v924
    %1784 = vst [vmem:[#allocation7 + $0x230] sm:$0xff] %v926
    %1785 = vst [vmem:[#allocation7 + $0x238] sm:$0xff] %v1581
    %1786 = vst [vmem:[#allocation7 + $0x240] sm:$0xff] %v930
    %1787 = vst [vmem:[#allocation7 + $0x248] sm:$0xff] %v932
    %1788 = vst [vmem:[#allocation7 + $0x250] sm:$0xff] %v1586
    %1789 = vst [vmem:[#allocation7 + $0x258] sm:$0xff] %v936
    %1790 = vst [vmem:[#allocation7 + $0x260] sm:$0xff] %v938
    %1791 = vst [vmem:[#allocation7 + $0x268] sm:$0xff] %v1591
    %1792 = vst [vmem:[#allocation7 + $0x270] sm:$0xff] %v942
    %1793 = vst [vmem:[#allocation7 + $0x278] sm:$0xff] %v944
    %1794 = vst [vmem:[#allocation7 + $0x280] sm:$0xff] %v1596
    %1795 = vst [vmem:[#allocation7 + $0x288] sm:$0xff] %v948
    %1796 = vst [vmem:[#allocation7 + $0x290] sm:$0xff] %v950
    %1797 = vst [vmem:[#allocation7 + $0x298] sm:$0xff] %v1601
    %1798 = vst [vmem:[#allocation7 + $0x2a0] sm:$0xff] %v954
    %1799 = vst [vmem:[#allocation7 + $0x2a8] sm:$0xff] %v956
    %1800 = vst [vmem:[#allocation7 + $0x2b0] sm:$0xff] %v1606
    %1801 = vst [vmem:[#allocation7 + $0x2b8] sm:$0xff] %v960
    %1802 = vst [vmem:[#allocation7 + $0x2c0] sm:$0xff] %v962
    %1803 = vst [vmem:[#allocation7 + $0x2c8] sm:$0xff] %v1611
    %1804 = vst [vmem:[#allocation7 + $0x2d0] sm:$0xff] %v966
    %1805 = vst [vmem:[#allocation7 + $0x2d8] sm:$0xff] %v968
    %1806 = vst [vmem:[#allocation7 + $0x2e0] sm:$0xff] %v1616
    %1807 = vst [vmem:[#allocation7 + $0x2e8] sm:$0xff] %v972
    %1808 = vst [vmem:[#allocation7 + $0x2f0] sm:$0xff] %v974
    %1809 = vst [vmem:[#allocation7 + $0x2f8] sm:$0xff] %v1621
    %1810 = vst [vmem:[#allocation7 + $0x300] sm:$0xff] %v978
    %1811 = vst [vmem:[#allocation7 + $0x308] sm:$0xff] %v980
    %1812 = vst [vmem:[#allocation7 + $0x310] sm:$0xff] %v1626
    %1813 = vst [vmem:[#allocation7 + $0x318] sm:$0xff] %v984
    %1814 = vst [vmem:[#allocation7 + $0x320] sm:$0xff] %v986
    %1815 = vst [vmem:[#allocation7 + $0x328] sm:$0xff] %v1631
    %1816 = vst [vmem:[#allocation7 + $0x330] sm:$0xff] %v990
    %1817 = vst [vmem:[#allocation7 + $0x338] sm:$0xff] %v992
    %1818 = vst [vmem:[#allocation7 + $0x340] sm:$0xff] %v1636
    %1819 = vst [vmem:[#allocation7 + $0x348] sm:$0xff] %v996
    %1820 = vst [vmem:[#allocation7 + $0x350] sm:$0xff] %v998
    %1821 = vst [vmem:[#allocation7 + $0x358] sm:$0xff] %v1641
    %1822 = vst [vmem:[#allocation7 + $0x360] sm:$0xff] %v1002
    %1823 = vst [vmem:[#allocation7 + $0x368] sm:$0xff] %v1004
    %1824 = vst [vmem:[#allocation7 + $0x370] sm:$0xff] %v1646
    %1825 = vst [vmem:[#allocation7 + $0x378] sm:$0xff] %v1008
    %1826 = vst [vmem:[#allocation7 + $0x380] sm:$0xff] %v1010
    %1827 = vst [vmem:[#allocation7 + $0x388] sm:$0xff] %v1651
    %1828 = vst [vmem:[#allocation7 + $0x390] sm:$0xff] %v1014
    %1829 = vst [vmem:[#allocation7 + $0x398] sm:$0xff] %v1016
    %1830 = vst [vmem:[#allocation7 + $0x3a0] sm:$0xff] %v1656
    %1831 = vst [vmem:[#allocation7 + $0x3a8] sm:$0xff] %v1020
    %1832 = vst [vmem:[#allocation7 + $0x3b0] sm:$0xff] %v1022
    %1833 = vst [vmem:[#allocation7 + $0x3b8] sm:$0xff] %v1661
    %1834 = vst [vmem:[#allocation7 + $0x3c0] sm:$0xff] %v1026
    %1835 = vst [vmem:[#allocation7 + $0x3c8] sm:$0xff] %v1028
    %1836 = vst [vmem:[#allocation7 + $0x3d0] sm:$0xff] %v1666
    %1837 = vst [vmem:[#allocation7 + $0x3d8] sm:$0xff] %v1032
    %1838 = vst [vmem:[#allocation7 + $0x3e0] sm:$0xff] %v1034
    %1839 = vst [vmem:[#allocation7 + $0x3e8] sm:$0xff] %v1671
    %1840 = vst [vmem:[#allocation7 + $0x3f0] sm:$0xff] %v1038
    %1841 = vst [vmem:[#allocation7 + $0x3f8] sm:$0xff] %v1040
    %1842 = vst [vmem:[#allocation7 + $0x400] sm:$0xff] %v1676
    %1843 = vst [vmem:[#allocation7 + $0x408] sm:$0xff] %v1044
    %1844 = vst [vmem:[#allocation7 + $0x410] sm:$0xff] %v1046
    %1845 = vst [vmem:[#allocation7 + $0x418] sm:$0xff] %v1681
    %1846 = vst [vmem:[#allocation7 + $0x420] sm:$0xff] %v1050
    %1847 = vst [vmem:[#allocation7 + $0x428] sm:$0xff] %v1052
    %1848 = vst [vmem:[#allocation7 + $0x430] sm:$0xff] %v1686
    %1849 = vst [vmem:[#allocation7 + $0x438] sm:$0xff] %v1056
    %1850 = vst [vmem:[#allocation7 + $0x440] sm:$0xff] %v1058
    %1851 = vst [vmem:[#allocation7 + $0x448] sm:$0xff] %v1691
    %1852 = vst [vmem:[#allocation7 + $0x450] sm:$0xff] %v1062
    %1853 = vst [vmem:[#allocation7 + $0x458] sm:$0xff] %v1064
    %1854 = vst [vmem:[#allocation7 + $0x460] sm:$0xff] %v1696
    %1855 = vst [vmem:[#allocation7 + $0x468] sm:$0xff] %v1068
    %1856 = vst [vmem:[#allocation7 + $0x470] sm:$0xff] %v1070
    %1857 = vst [vmem:[#allocation7 + $0x478] sm:$0xff] %v1701
    %1858 = vst [vmem:[#allocation7 + $0x480] sm:$0xff] %v1074
    %1859 = vst [vmem:[#allocation7 + $0x488] sm:$0xff] %v1076
    %1860 = vst [vmem:[#allocation7 + $0x490] sm:$0xff] %v1706
    %1861 = vst [vmem:[#allocation7 + $0x498] sm:$0xff] %v1080
    %1862 = vst [vmem:[#allocation7 + $0x4a0] sm:$0xff] %v1082
    %1863 = vst [vmem:[#allocation7 + $0x4a8] sm:$0xff] %v1711
    // Predicated region
    $region22: #{tpu_custom_call.1} parent=1 // pred_check
      _
    $region23: #{tpu_custom_call.1} parent=1 // pred_check_branch
      %1865 = sbr.rel (0) target = $region25
    $region24: #{tpu_custom_call.1} parent=1 // pred_region
      %s1867 = ssub.s32 19200, 19200
      %1868 = vsyncadd [#allocation4], %s1867
      %s1869 = sshll.u32 [#allocation7], 4
      %s1870 = int_to_ptr.vmem [resolvable:$true] %s1869
      %1875 = dma.vmem_to_hbm [thread:$0]  %s1870, 19200, %s3, [#allocation4], 384, 384, 24
    $region25: #{tpu_custom_call.1} parent=1 // pred_fallthru
      _
    // Predicated region
    $region26: #{tpu_custom_call.1} parent=1 // pred_check
      _
    $region27: #{tpu_custom_call.1} parent=1 // pred_check_branch
      %1877 = sbr.rel (0) target = $region29
    $region28: #{tpu_custom_call.1} parent=1 // pred_region
      %1878 = dma.done [#allocation4], 19200
    $region29: #{tpu_custom_call.1} parent=1 // pred_fallthru
      _
    %1879 = vsyncpa [#allocation3], 1
    %1880 = vsyncpa [#allocation6], 1
    %1881 = vsyncpa [#allocation4], 1

</llo_original>
